<compile_context>
chip_gen: v5e
topology: v5e:2x2
jax: 0.10.0
libtpu: 0.0.40
codegen_flags: <defaults>
</compile_context>

<pallas_src>
import functools
import math

import jax
import jax.numpy as jnp
from jax.experimental import pallas as pl
from jax.experimental.pallas import tpu as pltpu


# ----------------------------------------------------------------------------
# Small LLaMA config (same structure as LLaMAConfig, scaled down)
# ----------------------------------------------------------------------------
VOCAB = 256
EMB_DIM = 64
NHEADS = 4
HEAD_DIM = EMB_DIM // NHEADS
NLAYERS = 2
NORM_EPS = 1e-5
HIDDEN_GROW = 8.0 / 3.0
MULTIPLE_OF = 32
ROPE_THETA = 10000.0
# GatedLinearUnit hidden dim (rounded up to multiple_of, as in fms)
HIDDEN_DIM = MULTIPLE_OF * math.ceil(EMB_DIM * HIDDEN_GROW / MULTIPLE_OF)  # 192

BATCH = 2
SEQ = 8


# ----------------------------------------------------------------------------
# Fused whole-model kernel: grid = (batch, layer)
# ----------------------------------------------------------------------------
def _llama_kernel(x_ref, cos_ref, sin_ref, bias_ref, ln_w_ref, wqkv_ref, wo_ref,
                  ff_ln_w_ref, wgu_ref, w2_ref, dec_w_ref, head_ref,
                  o_ref, x_scr, *, nheads, head_dim, eps):
    f32 = jnp.float32
    bf16 = jnp.bfloat16
    l = pl.program_id(1)
    nlayers = pl.num_programs(1)

    # Initialise the resident residual stream from the embeddings at layer 0.
    @pl.when(l == 0)
    def _():
        x_scr[...] = x_ref[...].astype(f32)

    x = x_scr[...]                                   # (S, D) f32, VMEM-resident
    d = x.shape[-1]
    hd = head_dim

    # RoPE tables: (S, hd) -> (S, D); a handful of vreg copies per step.
    cos = jnp.concatenate([cos_ref[...]] * nheads, axis=-1)
    sin = jnp.concatenate([sin_ref[...]] * nheads, axis=-1)

    # ---- attention sub-layer: RMSNorm -> fused QKV(+rot) -> RoPE ----
    ms = jnp.mean(x * x, axis=-1, keepdims=True)
    h = (x * jax.lax.rsqrt(ms + eps) * ln_w_ref[0]).astype(bf16)

    qkv = jnp.dot(h, wqkv_ref[0], preferred_element_type=f32)       # (S, 5D)
    # Rotation + 1/sqrt(hd) scale are folded into the weights: columns are
    # [wq*s, (wq@R)*s, wk, wk@R, wv], so RoPE is just a*cos + a_rot*sin.
    q = qkv[:, 0 * d:1 * d] * cos + qkv[:, 1 * d:2 * d] * sin
    k = qkv[:, 2 * d:3 * d] * cos + qkv[:, 3 * d:4 * d] * sin
    v = qkv[:, 4 * d:5 * d]

    # ---- causal attention, batched over heads ----
    q = q.astype(bf16)
    k = k.astype(bf16)
    v = v.astype(bf16)
    q3 = jnp.stack([q[:, i * hd:(i + 1) * hd] for i in range(nheads)], axis=0)
    k3 = jnp.stack([k[:, i * hd:(i + 1) * hd] for i in range(nheads)], axis=0)
    v3 = jnp.stack([v[:, i * hd:(i + 1) * hd] for i in range(nheads)], axis=0)

    s = jnp.einsum('hqd,hkd->hqk', q3, k3,
                   preferred_element_type=f32)                       # (H, S, S)
    s = s + bias_ref[...][None, :, :]                                # additive mask
    s = s - jnp.max(s, axis=-1, keepdims=True)
    p = jnp.exp(s)
    inv = pl.reciprocal(jnp.sum(p, axis=-1, keepdims=True), approx=True)
    o3 = jnp.einsum('hqk,hkd->hqd', (p * inv).astype(bf16), v3,
                    preferred_element_type=f32)                      # (H, S, hd)
    o2 = jnp.concatenate([o3[i] for i in range(nheads)],
                         axis=-1).astype(bf16)                       # (S, D)
    attn = jnp.dot(o2, wo_ref[0], preferred_element_type=f32)        # (S, D)

    x1 = x + attn                                                    # residual

    # ---- feed-forward sub-layer: RMSNorm -> fused wg|w1 -> SiLU gate -> w2 ----
    ms2 = jnp.mean(x1 * x1, axis=-1, keepdims=True)
    h2 = (x1 * jax.lax.rsqrt(ms2 + eps) * ff_ln_w_ref[0]).astype(bf16)
    gu = jnp.dot(h2, wgu_ref[0], preferred_element_type=f32)         # (S, 2*HID)
    hid = gu.shape[-1] // 2
    g = gu[:, :hid]
    u = gu[:, hid:]
    act = (g * jax.nn.sigmoid(g) * u).astype(bf16)                   # swish gate
    ff = jnp.dot(act, w2_ref[0], preferred_element_type=f32)
    x2 = x1 + ff                                                     # residual

    x_scr[...] = x2                                                  # carry to next layer

    # ---- final decoder RMSNorm + LM head, fused into the last layer step ----
    @pl.when(l == nlayers - 1)
    def _():
        ms3 = jnp.mean(x2 * x2, axis=-1, keepdims=True)
        h3 = (x2 * jax.lax.rsqrt(ms3 + eps) * dec_w_ref[...]).astype(bf16)
        o_ref[...] = jnp.dot(h3, head_ref[...],
                             preferred_element_type=f32).astype(o_ref.dtype)


# ----------------------------------------------------------------------------
# Host-side glue
# ----------------------------------------------------------------------------
def _rope_tables(seq, head_dim, theta=ROPE_THETA):
    """Interleaved cos/sin tables of shape (S, head_dim), shared by all layers."""
    pos = jnp.arange(seq, dtype=jnp.float32)
    inv_freq = 1.0 / (theta ** (jnp.arange(0, head_dim, 2, dtype=jnp.float32)
                                / head_dim))
    ang = pos[:, None] * inv_freq[None, :]                 # (S, hd/2)
    cos = jnp.repeat(jnp.cos(ang), 2, axis=-1)             # (S, hd)
    sin = jnp.repeat(jnp.sin(ang), 2, axis=-1)
    return cos, sin


def _causal_bias(seq):
    idx = jnp.arange(seq)
    return jnp.where(idx[:, None] >= idx[None, :], 0.0, -1e30).astype(jnp.float32)


def _cost_estimate(batch, seq):
    d, h, hd, hid, v, nl = EMB_DIM, NHEADS, HEAD_DIM, HIDDEN_DIM, VOCAB, NLAYERS
    per_layer = (2 * seq * d * 5 * d            # fused QKV(+rot) projection
                 + 2 * 2 * h * seq * seq * hd   # scores + p@v
                 + 2 * seq * d * d              # output projection
                 + 2 * seq * d * 2 * hid        # wg | w1
                 + 2 * seq * hid * d)           # w2
    flops = batch * (nl * per_layer + 2 * seq * d * v)
    transcendentals = batch * nl * (h * seq * seq + seq * hid)
    w_bytes = nl * (d * 5 * d + d * d + d * 2 * hid + hid * d) * 2
    bytes_accessed = batch * (w_bytes + seq * d * 4 + seq * v * 4) + d * v * 2
    return pl.CostEstimate(flops=int(flops), transcendentals=int(transcendentals),
                           bytes_accessed=int(bytes_accessed))


def llama_forward(tokens, params):
    B, S = tokens.shape
    D, hd, HID, V, L = EMB_DIM, HEAD_DIM, HIDDEN_DIM, VOCAB, NLAYERS

    # WordEmbedding (abs_pos=False, reversible, no scaling); pad_id=-1 => no
    # padding handling.  Gather stays in plain JAX (not a Pallas-friendly op).
    x2 = jnp.take(params["emb"], tokens, axis=0).reshape(B * S, D)

    cos, sin = _rope_tables(S, hd)
    bias = _causal_bias(S)

    kernel = functools.partial(_llama_kernel, nheads=NHEADS, head_dim=hd,
                               eps=NORM_EPS)

    grid_spec = pltpu.PrefetchScalarGridSpec(
        num_scalar_prefetch=0,
        grid=(B, L),
        in_specs=[
            pl.BlockSpec((S, D), lambda b, l: (b, 0)),                 # x (embeddings)
            pl.BlockSpec((S, hd), lambda b, l: (0, 0)),                # cos (resident)
            pl.BlockSpec((S, hd), lambda b, l: (0, 0)),                # sin (resident)
            pl.BlockSpec((S, S), lambda b, l: (0, 0)),                 # causal bias
            pl.BlockSpec((1, 1, D), lambda b, l: (l, 0, 0)),           # ln weight
            pl.BlockSpec((1, D, 5 * D), lambda b, l: (l, 0, 0)),       # wq|wq_rot|wk|wk_rot|wv
            pl.BlockSpec((1, D, D), lambda b, l: (l, 0, 0)),           # wo
            pl.BlockSpec((1, 1, D), lambda b, l: (l, 0, 0)),           # ff_ln weight
            pl.BlockSpec((1, D, 2 * HID), lambda b, l: (l, 0, 0)),     # wg|w1
            pl.BlockSpec((1, HID, D), lambda b, l: (l, 0, 0)),         # w2
            pl.BlockSpec((1, D), lambda b, l: (0, 0)),                 # dec_norm weight
            pl.BlockSpec((D, V), lambda b, l: (0, 0)),                 # LM head
        ],
        out_specs=pl.BlockSpec((S, V), lambda b, l: (b, 0)),
        scratch_shapes=[pltpu.VMEM((S, D), jnp.float32)],              # resident residual
    )

    logits = pl.pallas_call(
        kernel,
        out_shape=jax.ShapeDtypeStruct((B * S, V), jnp.float32),
        grid_spec=grid_spec,
        compiler_params=pltpu.CompilerParams(
            dimension_semantics=("parallel", "arbitrary"),
            vmem_limit_bytes=64 * 1024 * 1024,
        ),
        cost_estimate=_cost_estimate(B, S),
    )(x2, cos, sin, bias, params["ln_w"], params["wqkv"], params["wo"],
      params["ff_ln_w"], params["wgu"], params["w2"],
      params["dec_norm_w"], params["head"])
    return logits.reshape(B, S, V)


# ----------------------------------------------------------------------------
# Deterministic parameter init (reset_parameters: normal(0, 0.02) / ones)
# ----------------------------------------------------------------------------
def _rotate_pairs_cols(w):
    """Exact columns of (w @ R): out[:, 2i] = -w[:, 2i+1], out[:, 2i+1] = w[:, 2i]."""
    d_in, d_out = w.shape
    wp = w.reshape(d_in, d_out // 2, 2)
    return jnp.stack([-wp[:, :, 1], wp[:, :, 0]], axis=-1).reshape(d_in, d_out)


def init_params(key):
    def nrm(k, shape):
        return jax.random.normal(k, shape, dtype=jnp.float32) * 0.02

    qscale = 1.0 / math.sqrt(HEAD_DIM)
    keys = jax.random.split(key, 2 + NLAYERS)

    ln_ws, ff_ln_ws, wqkvs, wos, wgus, w2s = [], [], [], [], [], []
    for i in range(NLAYERS):
        lk = jax.random.split(keys[2 + i], 7)
        wq = nrm(lk[0], (EMB_DIM, EMB_DIM))
        wk = nrm(lk[1], (EMB_DIM, EMB_DIM))
        wv = nrm(lk[2], (EMB_DIM, EMB_DIM))
        wo = nrm(lk[3], (EMB_DIM, EMB_DIM))
        wg = nrm(lk[4], (EMB_DIM, HIDDEN_DIM))
        w1 = nrm(lk[5], (EMB_DIM, HIDDEN_DIM))
        w2 = nrm(lk[6], (HIDDEN_DIM, EMB_DIM))
        # Linear weights stored as (in, out) == PyTorch weight.T.
        # RoPE rotation and the 1/sqrt(hd) score scale are folded into Q/K here.
        wqkv = jnp.concatenate(
            [wq * qscale, _rotate_pairs_cols(wq) * qscale,
             wk, _rotate_pairs_cols(wk), wv], axis=1).astype(jnp.bfloat16)
        ln_ws.append(jnp.ones((1, EMB_DIM), jnp.float32))
        ff_ln_ws.append(jnp.ones((1, EMB_DIM), jnp.float32))
        wqkvs.append(wqkv)
        wos.append(wo.astype(jnp.bfloat16))
        wgus.append(jnp.concatenate([wg, w1], axis=1).astype(jnp.bfloat16))
        w2s.append(w2.astype(jnp.bfloat16))

    params = {
        "emb": nrm(keys[0], (VOCAB, EMB_DIM)),
        # reversible head, tie_heads=False => independent head weight, stored (D, V)
        "head": nrm(keys[1], (EMB_DIM, VOCAB)).astype(jnp.bfloat16),
        "dec_norm_w": jnp.ones((1, EMB_DIM), jnp.float32),
        "ln_w": jnp.stack(ln_ws, axis=0),        # (L, 1, D)
        "ff_ln_w": jnp.stack(ff_ln_ws, axis=0),  # (L, 1, D)
        "wqkv": jnp.stack(wqkvs, axis=0),        # (L, D, 5D) bf16
        "wo": jnp.stack(wos, axis=0),            # (L, D, D)  bf16
        "wgu": jnp.stack(wgus, axis=0),          # (L, D, 2*HID) bf16
        "w2": jnp.stack(w2s, axis=0),            # (L, HID, D) bf16
    }
    return params


# TODO(synk): use_cache / past_key_value_states (incremental decoding) path is
# not implemented; only the full-sequence causal forward is reproduced.

if __name__ == "__main__":
    root = jax.random.PRNGKey(0)
    pk, tk = jax.random.split(root)
    params = init_params(pk)
    tokens = jax.random.randint(tk, (BATCH, SEQ), 0, VOCAB, dtype=jnp.int32)

    fwd = jax.jit(llama_forward)
    logits = fwd(tokens, params)
    jax.block_until_ready(logits)
    assert logits.shape == (BATCH, SEQ, VOCAB)
    assert bool(jnp.all(jnp.isfinite(logits)))
    print("KERNEL_OK")
</pallas_src>

<mosaic_0001>
module attributes {stable_mosaic.version = 11 : i64} {
  func.func @_llama_kernel(%arg0: i32, %arg1: i32, %arg2: memref<8x64xf32, #tpu.memory_space<vmem>>, %arg3: memref<8x16xf32, #tpu.memory_space<vmem>>, %arg4: memref<8x16xf32, #tpu.memory_space<vmem>>, %arg5: memref<8x8xf32, #tpu.memory_space<vmem>>, %arg6: memref<1x1x64xf32, #tpu.memory_space<vmem>>, %arg7: memref<1x64x320xbf16, #tpu.memory_space<vmem>>, %arg8: memref<1x64x64xbf16, #tpu.memory_space<vmem>>, %arg9: memref<1x1x64xf32, #tpu.memory_space<vmem>>, %arg10: memref<1x64x384xbf16, #tpu.memory_space<vmem>>, %arg11: memref<1x192x64xbf16, #tpu.memory_space<vmem>>, %arg12: memref<1x64xf32, #tpu.memory_space<vmem>>, %arg13: memref<64x256xbf16, #tpu.memory_space<vmem>>, %arg14: memref<8x256xf32, #tpu.memory_space<vmem>>, %arg15: memref<8x64xf32, #tpu.memory_space<vmem>>) attributes {dimension_semantics = [#tpu.dimension_semantics<parallel>, #tpu.dimension_semantics<arbitrary>], iteration_bounds = array<i64: 2, 2>, scalar_prefetch = 0 : i64, scratch_operands = 1 : i64, tpu.core_type = #tpu.core_type<tc>, window_params = [{transform_indices = @transform_0, window_bounds = array<i64: 8, 64>}, {pipeline_mode = #tpu.pipeline_mode<synchronous>, transform_indices = @transform_1, window_bounds = array<i64: 8, 16>}, {pipeline_mode = #tpu.pipeline_mode<synchronous>, transform_indices = @transform_2, window_bounds = array<i64: 8, 16>}, {pipeline_mode = #tpu.pipeline_mode<synchronous>, transform_indices = @transform_3, window_bounds = array<i64: 8, 8>}, {transform_indices = @transform_4, window_bounds = array<i64: 1, 1, 64>}, {transform_indices = @transform_5, window_bounds = array<i64: 1, 64, 320>}, {transform_indices = @transform_6, window_bounds = array<i64: 1, 64, 64>}, {transform_indices = @transform_7, window_bounds = array<i64: 1, 1, 64>}, {transform_indices = @transform_8, window_bounds = array<i64: 1, 64, 384>}, {transform_indices = @transform_9, window_bounds = array<i64: 1, 192, 64>}, {pipeline_mode = #tpu.pipeline_mode<synchronous>, transform_indices = @transform_10, window_bounds = array<i64: 1, 64>}, {pipeline_mode = #tpu.pipeline_mode<synchronous>, transform_indices = @transform_11, window_bounds = array<i64: 64, 256>}, {transform_indices = @transform_12, window_bounds = array<i64: 8, 256>}]} {
    %c0_i32 = arith.constant 0 : i32
    %0 = arith.cmpi eq, %arg1, %c0_i32 : i32
    %1 = arith.extui %0 : i1 to i32
    %c0_i32_0 = arith.constant 0 : i32
    %2 = arith.cmpi ne, %1, %c0_i32_0 : i32
    scf.if %2 {
      %c0_43 = arith.constant 0 : index
      %c0_44 = arith.constant 0 : index
      %134 = vector.load %arg2[%c0_43, %c0_44] : memref<8x64xf32, #tpu.memory_space<vmem>>, vector<8x64xf32>
      %c0_45 = arith.constant 0 : index
      %c0_46 = arith.constant 0 : index
      %135 = vector.load %arg15[%c0_45, %c0_46] : memref<8x64xf32, #tpu.memory_space<vmem>>, vector<8x64xf32>
      tpu.vector_store %arg15[%c0_45, %c0_46], %134 {strides = array<i32>} : memref<8x64xf32, #tpu.memory_space<vmem>>, vector<8x64xf32>,
    } else {
    }
    %c0 = arith.constant 0 : index
    %c0_1 = arith.constant 0 : index
    %3 = vector.load %arg15[%c0, %c0_1] : memref<8x64xf32, #tpu.memory_space<vmem>>, vector<8x64xf32>
    %c0_2 = arith.constant 0 : index
    %c0_3 = arith.constant 0 : index
    %4 = vector.load %arg3[%c0_2, %c0_3] : memref<8x16xf32, #tpu.memory_space<vmem>>, vector<8x16xf32>
    %5 = tpu.concatenate %4, %4, %4, %4 in 1 : vector<8x16xf32>, vector<8x16xf32>, vector<8x16xf32>, vector<8x16xf32> -> vector<8x64xf32>
    %c0_4 = arith.constant 0 : index
    %c0_5 = arith.constant 0 : index
    %6 = vector.load %arg4[%c0_4, %c0_5] : memref<8x16xf32, #tpu.memory_space<vmem>>, vector<8x16xf32>
    %7 = tpu.concatenate %6, %6, %6, %6 in 1 : vector<8x16xf32>, vector<8x16xf32>, vector<8x16xf32>, vector<8x16xf32> -> vector<8x64xf32>
    %8 = arith.mulf %3, %3 : vector<8x64xf32>
    %cst = arith.constant dense<0.000000e+00> : vector<8xf32>
    %9 = vector.multi_reduction <add>, %8, %cst [1] : vector<8x64xf32> to vector<8xf32>
    %10 = vector.shape_cast %9 : vector<8xf32> to vector<8x1xf32>
    %cst_6 = arith.constant 6.400000e+01 : f32
    %11 = vector.broadcast %cst_6 : f32 to vector<8x1xf32>
    %12 = arith.divf %10, %11 : vector<8x1xf32>
    %cst_7 = arith.constant 9.99999974E-6 : f32
    %13 = vector.broadcast %cst_7 : f32 to vector<8x1xf32>
    %14 = arith.addf %12, %13 : vector<8x1xf32>
    %15 = math.rsqrt %14 : vector<8x1xf32>
    %16 = vector.broadcast %15 : vector<8x1xf32> to vector<8x64xf32>
    %17 = arith.mulf %3, %16 : vector<8x64xf32>
    %c0_8 = arith.constant 0 : index
    %c0_9 = arith.constant 0 : index
    %c0_10 = arith.constant 0 : index
    %18 = vector.load %arg6[%c0_8, %c0_9, %c0_10] : memref<1x1x64xf32, #tpu.memory_space<vmem>>, vector<1x1x64xf32>
    %19 = vector.shape_cast %18 : vector<1x1x64xf32> to vector<1x64xf32>
    %20 = vector.broadcast %19 : vector<1x64xf32> to vector<8x64xf32>
    %21 = arith.mulf %17, %20 : vector<8x64xf32>
    %22 = arith.truncf %21 : vector<8x64xf32> to vector<8x64xbf16>
    %c0_11 = arith.constant 0 : index
    %c0_12 = arith.constant 0 : index
    %c0_13 = arith.constant 0 : index
    %23 = vector.load %arg7[%c0_11, %c0_12, %c0_13] : memref<1x64x320xbf16, #tpu.memory_space<vmem>>, vector<1x64x320xbf16>
    %24 = vector.shape_cast %23 : vector<1x64x320xbf16> to vector<64x320xbf16>
    %cst_14 = arith.constant dense<0.000000e+00> : vector<8x320xf32>
    %25 = tpu.matmul %22, %24, %cst_14 {dimension_numbers = #tpu.dot_dimension_numbers<[1], [0], [0], [1], [0, 0, 1, 1], [], []>} : vector<8x64xbf16>, vector<64x320xbf16>, vector<8x320xf32> -> vector<8x320xf32>
    %26 = vector.extract_strided_slice %25 {offsets = [0, 0], sizes = [8, 64], strides = [1, 1]} : vector<8x320xf32> to vector<8x64xf32>
    %27 = arith.mulf %26, %5 : vector<8x64xf32>
    %28 = vector.extract_strided_slice %25 {offsets = [0, 64], sizes = [8, 64], strides = [1, 1]} : vector<8x320xf32> to vector<8x64xf32>
    %29 = arith.mulf %28, %7 : vector<8x64xf32>
    %30 = arith.addf %27, %29 : vector<8x64xf32>
    %31 = vector.extract_strided_slice %25 {offsets = [0, 128], sizes = [8, 64], strides = [1, 1]} : vector<8x320xf32> to vector<8x64xf32>
    %32 = arith.mulf %31, %5 : vector<8x64xf32>
    %33 = vector.extract_strided_slice %25 {offsets = [0, 192], sizes = [8, 64], strides = [1, 1]} : vector<8x320xf32> to vector<8x64xf32>
    %34 = arith.mulf %33, %7 : vector<8x64xf32>
    %35 = arith.addf %32, %34 : vector<8x64xf32>
    %36 = vector.extract_strided_slice %25 {offsets = [0, 256], sizes = [8, 64], strides = [1, 1]} : vector<8x320xf32> to vector<8x64xf32>
    %37 = arith.truncf %30 : vector<8x64xf32> to vector<8x64xbf16>
    %38 = arith.truncf %35 : vector<8x64xf32> to vector<8x64xbf16>
    %39 = arith.truncf %36 : vector<8x64xf32> to vector<8x64xbf16>
    %40 = vector.extract_strided_slice %37 {offsets = [0, 0], sizes = [8, 16], strides = [1, 1]} : vector<8x64xbf16> to vector<8x16xbf16>
    %41 = vector.extract_strided_slice %37 {offsets = [0, 16], sizes = [8, 16], strides = [1, 1]} : vector<8x64xbf16> to vector<8x16xbf16>
    %42 = vector.extract_strided_slice %37 {offsets = [0, 32], sizes = [8, 16], strides = [1, 1]} : vector<8x64xbf16> to vector<8x16xbf16>
    %43 = vector.extract_strided_slice %37 {offsets = [0, 48], sizes = [8, 16], strides = [1, 1]} : vector<8x64xbf16> to vector<8x16xbf16>
    %44 = vector.shape_cast %40 : vector<8x16xbf16> to vector<1x8x16xbf16>
    %45 = vector.shape_cast %41 : vector<8x16xbf16> to vector<1x8x16xbf16>
    %46 = vector.shape_cast %42 : vector<8x16xbf16> to vector<1x8x16xbf16>
    %47 = vector.shape_cast %43 : vector<8x16xbf16> to vector<1x8x16xbf16>
    %48 = tpu.concatenate %44, %45, %46, %47 in 0 : vector<1x8x16xbf16>, vector<1x8x16xbf16>, vector<1x8x16xbf16>, vector<1x8x16xbf16> -> vector<4x8x16xbf16>
    %49 = vector.extract_strided_slice %38 {offsets = [0, 0], sizes = [8, 16], strides = [1, 1]} : vector<8x64xbf16> to vector<8x16xbf16>
    %50 = vector.extract_strided_slice %38 {offsets = [0, 16], sizes = [8, 16], strides = [1, 1]} : vector<8x64xbf16> to vector<8x16xbf16>
    %51 = vector.extract_strided_slice %38 {offsets = [0, 32], sizes = [8, 16], strides = [1, 1]} : vector<8x64xbf16> to vector<8x16xbf16>
    %52 = vector.extract_strided_slice %38 {offsets = [0, 48], sizes = [8, 16], strides = [1, 1]} : vector<8x64xbf16> to vector<8x16xbf16>
    %53 = vector.shape_cast %49 : vector<8x16xbf16> to vector<1x8x16xbf16>
    %54 = vector.shape_cast %50 : vector<8x16xbf16> to vector<1x8x16xbf16>
    %55 = vector.shape_cast %51 : vector<8x16xbf16> to vector<1x8x16xbf16>
    %56 = vector.shape_cast %52 : vector<8x16xbf16> to vector<1x8x16xbf16>
    %57 = tpu.concatenate %53, %54, %55, %56 in 0 : vector<1x8x16xbf16>, vector<1x8x16xbf16>, vector<1x8x16xbf16>, vector<1x8x16xbf16> -> vector<4x8x16xbf16>
    %58 = vector.extract_strided_slice %39 {offsets = [0, 0], sizes = [8, 16], strides = [1, 1]} : vector<8x64xbf16> to vector<8x16xbf16>
    %59 = vector.extract_strided_slice %39 {offsets = [0, 16], sizes = [8, 16], strides = [1, 1]} : vector<8x64xbf16> to vector<8x16xbf16>
    %60 = vector.extract_strided_slice %39 {offsets = [0, 32], sizes = [8, 16], strides = [1, 1]} : vector<8x64xbf16> to vector<8x16xbf16>
    %61 = vector.extract_strided_slice %39 {offsets = [0, 48], sizes = [8, 16], strides = [1, 1]} : vector<8x64xbf16> to vector<8x16xbf16>
    %62 = vector.shape_cast %58 : vector<8x16xbf16> to vector<1x8x16xbf16>
    %63 = vector.shape_cast %59 : vector<8x16xbf16> to vector<1x8x16xbf16>
    %64 = vector.shape_cast %60 : vector<8x16xbf16> to vector<1x8x16xbf16>
    %65 = vector.shape_cast %61 : vector<8x16xbf16> to vector<1x8x16xbf16>
    %66 = tpu.concatenate %62, %63, %64, %65 in 0 : vector<1x8x16xbf16>, vector<1x8x16xbf16>, vector<1x8x16xbf16>, vector<1x8x16xbf16> -> vector<4x8x16xbf16>
    "tpu.trace_start"() <{level = 10 : i32, message = "hqd,hkd->hqk"}> : () -> ()
    %cst_15 = arith.constant dense<0.000000e+00> : vector<4x8x8xf32>
    %67 = tpu.matmul %48, %57, %cst_15 {dimension_numbers = #tpu.dot_dimension_numbers<[2], [2], [1], [1], [0, 0, 0, 1, 1, 1], [0], [0]>} : vector<4x8x16xbf16>, vector<4x8x16xbf16>, vector<4x8x8xf32> -> vector<4x8x8xf32>
    "tpu.trace_stop"() : () -> ()
    %c0_16 = arith.constant 0 : index
    %c0_17 = arith.constant 0 : index
    %68 = vector.load %arg5[%c0_16, %c0_17] : memref<8x8xf32, #tpu.memory_space<vmem>>, vector<8x8xf32>
    %69 = vector.shape_cast %68 : vector<8x8xf32> to vector<1x8x8xf32>
    %70 = vector.broadcast %69 : vector<1x8x8xf32> to vector<4x8x8xf32>
    %71 = arith.addf %67, %70 : vector<4x8x8xf32>
    %cst_18 = arith.constant dense<0xFF800000> : vector<4x8xf32>
    %72 = vector.multi_reduction <maximumf>, %71, %cst_18 [2] : vector<4x8x8xf32> to vector<4x8xf32>
    %73 = vector.shape_cast %72 : vector<4x8xf32> to vector<4x8x1xf32>
    %74 = vector.broadcast %73 : vector<4x8x1xf32> to vector<4x8x8xf32>
    %75 = arith.subf %71, %74 : vector<4x8x8xf32>
    %76 = math.exp %75 : vector<4x8x8xf32>
    %cst_19 = arith.constant dense<0.000000e+00> : vector<4x8xf32>
    %77 = vector.multi_reduction <add>, %76, %cst_19 [2] : vector<4x8x8xf32> to vector<4x8xf32>
    %78 = vector.shape_cast %77 : vector<4x8xf32> to vector<4x8x1xf32>
    %79 = tpu.reciprocal %78 {approx = true} : vector<4x8x1xf32> -> vector<4x8x1xf32>
    %80 = vector.broadcast %79 : vector<4x8x1xf32> to vector<4x8x8xf32>
    %81 = arith.mulf %76, %80 : vector<4x8x8xf32>
    %82 = arith.truncf %81 : vector<4x8x8xf32> to vector<4x8x8xbf16>
    "tpu.trace_start"() <{level = 10 : i32, message = "hqk,hkd->hqd"}> : () -> ()
    %cst_20 = arith.constant dense<0.000000e+00> : vector<4x8x16xf32>
    %83 = tpu.matmul %82, %66, %cst_20 {dimension_numbers = #tpu.dot_dimension_numbers<[2], [1], [1], [2], [0, 0, 0, 1, 1, 2], [0], [0]>} : vector<4x8x8xbf16>, vector<4x8x16xbf16>, vector<4x8x16xf32> -> vector<4x8x16xf32>
    "tpu.trace_stop"() : () -> ()
    %84 = vector.extract_strided_slice %83 {offsets = [0, 0, 0], sizes = [1, 8, 16], strides = [1, 1, 1]} : vector<4x8x16xf32> to vector<1x8x16xf32>
    %85 = vector.shape_cast %84 : vector<1x8x16xf32> to vector<8x16xf32>
    %86 = vector.extract_strided_slice %83 {offsets = [1, 0, 0], sizes = [1, 8, 16], strides = [1, 1, 1]} : vector<4x8x16xf32> to vector<1x8x16xf32>
    %87 = vector.shape_cast %86 : vector<1x8x16xf32> to vector<8x16xf32>
    %88 = vector.extract_strided_slice %83 {offsets = [2, 0, 0], sizes = [1, 8, 16], strides = [1, 1, 1]} : vector<4x8x16xf32> to vector<1x8x16xf32>
    %89 = vector.shape_cast %88 : vector<1x8x16xf32> to vector<8x16xf32>
    %90 = vector.extract_strided_slice %83 {offsets = [3, 0, 0], sizes = [1, 8, 16], strides = [1, 1, 1]} : vector<4x8x16xf32> to vector<1x8x16xf32>
    %91 = vector.shape_cast %90 : vector<1x8x16xf32> to vector<8x16xf32>
    %92 = tpu.concatenate %85, %87, %89, %91 in 1 : vector<8x16xf32>, vector<8x16xf32>, vector<8x16xf32>, vector<8x16xf32> -> vector<8x64xf32>
    %93 = arith.truncf %92 : vector<8x64xf32> to vector<8x64xbf16>
    %c0_21 = arith.constant 0 : index
    %c0_22 = arith.constant 0 : index
    %c0_23 = arith.constant 0 : index
    %94 = vector.load %arg8[%c0_21, %c0_22, %c0_23] : memref<1x64x64xbf16, #tpu.memory_space<vmem>>, vector<1x64x64xbf16>
    %95 = vector.shape_cast %94 : vector<1x64x64xbf16> to vector<64x64xbf16>
    %cst_24 = arith.constant dense<0.000000e+00> : vector<8x64xf32>
    %96 = tpu.matmul %93, %95, %cst_24 {dimension_numbers = #tpu.dot_dimension_numbers<[1], [0], [0], [1], [0, 0, 1, 1], [], []>} : vector<8x64xbf16>, vector<64x64xbf16>, vector<8x64xf32> -> vector<8x64xf32>
    %97 = arith.addf %3, %96 : vector<8x64xf32>
    %98 = arith.mulf %97, %97 : vector<8x64xf32>
    %cst_25 = arith.constant dense<0.000000e+00> : vector<8xf32>
    %99 = vector.multi_reduction <add>, %98, %cst_25 [1] : vector<8x64xf32> to vector<8xf32>
    %100 = vector.shape_cast %99 : vector<8xf32> to vector<8x1xf32>
    %cst_26 = arith.constant 6.400000e+01 : f32
    %101 = vector.broadcast %cst_26 : f32 to vector<8x1xf32>
    %102 = arith.divf %100, %101 : vector<8x1xf32>
    %cst_27 = arith.constant 9.99999974E-6 : f32
    %103 = vector.broadcast %cst_27 : f32 to vector<8x1xf32>
    %104 = arith.addf %102, %103 : vector<8x1xf32>
    %105 = math.rsqrt %104 : vector<8x1xf32>
    %106 = vector.broadcast %105 : vector<8x1xf32> to vector<8x64xf32>
    %107 = arith.mulf %97, %106 : vector<8x64xf32>
    %c0_28 = arith.constant 0 : index
    %c0_29 = arith.constant 0 : index
    %c0_30 = arith.constant 0 : index
    %108 = vector.load %arg9[%c0_28, %c0_29, %c0_30] : memref<1x1x64xf32, #tpu.memory_space<vmem>>, vector<1x1x64xf32>
    %109 = vector.shape_cast %108 : vector<1x1x64xf32> to vector<1x64xf32>
    %110 = vector.broadcast %109 : vector<1x64xf32> to vector<8x64xf32>
    %111 = arith.mulf %107, %110 : vector<8x64xf32>
    %112 = arith.truncf %111 : vector<8x64xf32> to vector<8x64xbf16>
    %c0_31 = arith.constant 0 : index
    %c0_32 = arith.constant 0 : index
    %c0_33 = arith.constant 0 : index
    %113 = vector.load %arg10[%c0_31, %c0_32, %c0_33] : memref<1x64x384xbf16, #tpu.memory_space<vmem>>, vector<1x64x384xbf16>
    %114 = vector.shape_cast %113 : vector<1x64x384xbf16> to vector<64x384xbf16>
    %cst_34 = arith.constant dense<0.000000e+00> : vector<8x384xf32>
    %115 = tpu.matmul %112, %114, %cst_34 {dimension_numbers = #tpu.dot_dimension_numbers<[1], [0], [0], [1], [0, 0, 1, 1], [], []>} : vector<8x64xbf16>, vector<64x384xbf16>, vector<8x384xf32> -> vector<8x384xf32>
    %116 = vector.extract_strided_slice %115 {offsets = [0, 0], sizes = [8, 192], strides = [1, 1]} : vector<8x384xf32> to vector<8x192xf32>
    %117 = vector.extract_strided_slice %115 {offsets = [0, 192], sizes = [8, 192], strides = [1, 1]} : vector<8x384xf32> to vector<8x192xf32>
    %118 = arith.negf %116 : vector<8x192xf32>
    %119 = math.exp %118 : vector<8x192xf32>
    %cst_35 = arith.constant 1.000000e+00 : f32
    %120 = vector.broadcast %cst_35 : f32 to vector<8x192xf32>
    %121 = arith.addf %120, %119 : vector<8x192xf32>
    %122 = arith.divf %120, %121 : vector<8x192xf32>
    %123 = arith.mulf %116, %122 : vector<8x192xf32>
    %124 = arith.mulf %123, %117 : vector<8x192xf32>
    %125 = arith.truncf %124 : vector<8x192xf32> to vector<8x192xbf16>
    %c0_36 = arith.constant 0 : index
    %c0_37 = arith.constant 0 : index
    %c0_38 = arith.constant 0 : index
    %126 = vector.load %arg11[%c0_36, %c0_37, %c0_38] : memref<1x192x64xbf16, #tpu.memory_space<vmem>>, vector<1x192x64xbf16>
    %127 = vector.shape_cast %126 : vector<1x192x64xbf16> to vector<192x64xbf16>
    %cst_39 = arith.constant dense<0.000000e+00> : vector<8x64xf32>
    %128 = tpu.matmul %125, %127, %cst_39 {dimension_numbers = #tpu.dot_dimension_numbers<[1], [0], [0], [1], [0, 0, 1, 1], [], []>} : vector<8x192xbf16>, vector<192x64xbf16>, vector<8x64xf32> -> vector<8x64xf32>
    %129 = arith.addf %97, %128 : vector<8x64xf32>
    %c0_40 = arith.constant 0 : index
    %c0_41 = arith.constant 0 : index
    %130 = vector.load %arg15[%c0_40, %c0_41] : memref<8x64xf32, #tpu.memory_space<vmem>>, vector<8x64xf32>
    tpu.vector_store %arg15[%c0_40, %c0_41], %129 {strides = array<i32>} : memref<8x64xf32, #tpu.memory_space<vmem>>, vector<8x64xf32>,
    %c1_i32 = arith.constant 1 : i32
    %131 = arith.cmpi eq, %arg1, %c1_i32 : i32
    %132 = arith.extui %131 : i1 to i32
    %c0_i32_42 = arith.constant 0 : i32
    %133 = arith.cmpi ne, %132, %c0_i32_42 : i32
    scf.if %133 {
      %134 = arith.mulf %129, %129 : vector<8x64xf32>
      %cst_43 = arith.constant dense<0.000000e+00> : vector<8xf32>
      %135 = vector.multi_reduction <add>, %134, %cst_43 [1] : vector<8x64xf32> to vector<8xf32>
      %136 = vector.shape_cast %135 : vector<8xf32> to vector<8x1xf32>
      %cst_44 = arith.constant 6.400000e+01 : f32
      %137 = vector.broadcast %cst_44 : f32 to vector<8x1xf32>
      %138 = arith.divf %136, %137 : vector<8x1xf32>
      %cst_45 = arith.constant 9.99999974E-6 : f32
      %139 = vector.broadcast %cst_45 : f32 to vector<8x1xf32>
      %140 = arith.addf %138, %139 : vector<8x1xf32>
      %141 = math.rsqrt %140 : vector<8x1xf32>
      %142 = vector.broadcast %141 : vector<8x1xf32> to vector<8x64xf32>
      %143 = arith.mulf %129, %142 : vector<8x64xf32>
      %c0_46 = arith.constant 0 : index
      %c0_47 = arith.constant 0 : index
      %144 = vector.load %arg12[%c0_46, %c0_47] : memref<1x64xf32, #tpu.memory_space<vmem>>, vector<1x64xf32>
      %145 = vector.broadcast %144 : vector<1x64xf32> to vector<8x64xf32>
      %146 = arith.mulf %143, %145 : vector<8x64xf32>
      %147 = arith.truncf %146 : vector<8x64xf32> to vector<8x64xbf16>
      %c0_48 = arith.constant 0 : index
      %c0_49 = arith.constant 0 : index
      %148 = vector.load %arg13[%c0_48, %c0_49] : memref<64x256xbf16, #tpu.memory_space<vmem>>, vector<64x256xbf16>
      %cst_50 = arith.constant dense<0.000000e+00> : vector<8x256xf32>
      %149 = tpu.matmul %147, %148, %cst_50 {dimension_numbers = #tpu.dot_dimension_numbers<[1], [0], [0], [1], [0, 0, 1, 1], [], []>} : vector<8x64xbf16>, vector<64x256xbf16>, vector<8x256xf32> -> vector<8x256xf32>
      %c0_51 = arith.constant 0 : index
      %c0_52 = arith.constant 0 : index
      %150 = vector.load %arg14[%c0_51, %c0_52] : memref<8x256xf32, #tpu.memory_space<vmem>>, vector<8x256xf32>
      tpu.vector_store %arg14[%c0_51, %c0_52], %149 {strides = array<i32>} : memref<8x256xf32, #tpu.memory_space<vmem>>, vector<8x256xf32>,
    } else {
    }
    return
  }
  func.func @transform_0(%arg0: i32, %arg1: i32) -> (i32, i32) {
    %c0_i32 = arith.constant 0 : i32
    %c0_i32_0 = arith.constant 0 : i32
    return %arg0, %c0_i32 : i32, i32
  }
  func.func @transform_1(%arg0: i32, %arg1: i32) -> (i32, i32) {
    %c0_i32 = arith.constant 0 : i32
    %c0_i32_0 = arith.constant 0 : i32
    %c0_i32_1 = arith.constant 0 : i32
    return %c0_i32, %c0_i32_0 : i32, i32
  }
  func.func @transform_2(%arg0: i32, %arg1: i32) -> (i32, i32) {
    %c0_i32 = arith.constant 0 : i32
    %c0_i32_0 = arith.constant 0 : i32
    %c0_i32_1 = arith.constant 0 : i32
    return %c0_i32, %c0_i32_0 : i32, i32
  }
  func.func @transform_3(%arg0: i32, %arg1: i32) -> (i32, i32) {
    %c0_i32 = arith.constant 0 : i32
    %c0_i32_0 = arith.constant 0 : i32
    %c0_i32_1 = arith.constant 0 : i32
    return %c0_i32, %c0_i32_0 : i32, i32
  }
  func.func @transform_4(%arg0: i32, %arg1: i32) -> (i32, i32, i32) {
    %c0_i32 = arith.constant 0 : i32
    %c0_i32_0 = arith.constant 0 : i32
    %c0_i32_1 = arith.constant 0 : i32
    return %arg1, %c0_i32, %c0_i32_0 : i32, i32, i32
  }
  func.func @transform_5(%arg0: i32, %arg1: i32) -> (i32, i32, i32) {
    %c0_i32 = arith.constant 0 : i32
    %c0_i32_0 = arith.constant 0 : i32
    %c0_i32_1 = arith.constant 0 : i32
    return %arg1, %c0_i32, %c0_i32_0 : i32, i32, i32
  }
  func.func @transform_6(%arg0: i32, %arg1: i32) -> (i32, i32, i32) {
    %c0_i32 = arith.constant 0 : i32
    %c0_i32_0 = arith.constant 0 : i32
    %c0_i32_1 = arith.constant 0 : i32
    return %arg1, %c0_i32, %c0_i32_0 : i32, i32, i32
  }
  func.func @transform_7(%arg0: i32, %arg1: i32) -> (i32, i32, i32) {
    %c0_i32 = arith.constant 0 : i32
    %c0_i32_0 = arith.constant 0 : i32
    %c0_i32_1 = arith.constant 0 : i32
    return %arg1, %c0_i32, %c0_i32_0 : i32, i32, i32
  }
  func.func @transform_8(%arg0: i32, %arg1: i32) -> (i32, i32, i32) {
    %c0_i32 = arith.constant 0 : i32
    %c0_i32_0 = arith.constant 0 : i32
    %c0_i32_1 = arith.constant 0 : i32
    return %arg1, %c0_i32, %c0_i32_0 : i32, i32, i32
  }
  func.func @transform_9(%arg0: i32, %arg1: i32) -> (i32, i32, i32) {
    %c0_i32 = arith.constant 0 : i32
    %c0_i32_0 = arith.constant 0 : i32
    %c0_i32_1 = arith.constant 0 : i32
    return %arg1, %c0_i32, %c0_i32_0 : i32, i32, i32
  }
  func.func @transform_10(%arg0: i32, %arg1: i32) -> (i32, i32) {
    %c0_i32 = arith.constant 0 : i32
    %c0_i32_0 = arith.constant 0 : i32
    %c0_i32_1 = arith.constant 0 : i32
    return %c0_i32, %c0_i32_0 : i32, i32
  }
  func.func @transform_11(%arg0: i32, %arg1: i32) -> (i32, i32) {
    %c0_i32 = arith.constant 0 : i32
    %c0_i32_0 = arith.constant 0 : i32
    %c0_i32_1 = arith.constant 0 : i32
    return %c0_i32, %c0_i32_0 : i32, i32
  }
  func.func @transform_12(%arg0: i32, %arg1: i32) -> (i32, i32) {
    %c0_i32 = arith.constant 0 : i32
    %c0_i32_0 = arith.constant 0 : i32
    return %arg0, %c0_i32 : i32, i32
  }
}

</mosaic_0001>

<llo_original>
// kernel: llama_forward.1
$region0: #{llama_forward.1}
  #allocation0 [shape = 'u32[]', space=smem, size = 0x4, offset = 0x4, fixed_abs, tag = 'smem constant byte address 0x4 - core index']
  #allocation1 [shape = 'u32[72,128]{1,0:T(1,128)}', space=vmem, size = 0x9000, scoped, tag = 'internal scratch']
  #allocation2 [shape = 'f32[8,64]{1,0:T(8,128)}', space=vmem, size = 0x1000, scoped, tag = 'scratch operand']
  %s0 = inlined_call_operand.vmem [shape: f32[16,64], index: 0, kind: input, shape index: {}]
  %s1 = inlined_call_operand.vmem [shape: f32[8,16], index: 1, kind: input, shape index: {}]
  %s2 = inlined_call_operand.vmem [shape: f32[8,16], index: 2, kind: input, shape index: {}]
  %s3 = inlined_call_operand.vmem [shape: f32[8,8], index: 3, kind: input, shape index: {}]
  %s4 = inlined_call_operand.vmem [shape: f32[2,1,64], index: 4, kind: input, shape index: {}]
  %s5 = inlined_call_operand.vmem [shape: bf16[2,64,320], index: 5, kind: input, shape index: {}]
  %s6 = inlined_call_operand.vmem [shape: bf16[2,64,64], index: 6, kind: input, shape index: {}]
  %s7 = inlined_call_operand.vmem [shape: f32[2,1,64], index: 7, kind: input, shape index: {}]
  %s8 = inlined_call_operand.vmem [shape: bf16[2,64,384], index: 8, kind: input, shape index: {}]
  %s9 = inlined_call_operand.vmem [shape: bf16[2,192,64], index: 9, kind: input, shape index: {}]
  %s10 = inlined_call_operand.vmem [shape: f32[1,64], index: 10, kind: input, shape index: {}]
  %s11 = inlined_call_operand.vmem [shape: bf16[64,256], index: 11, kind: input, shape index: {}]
  %s12 = inlined_call_operand.hbm [shape: f32[16,256], index: 12, kind: output, shape index: {}]
  %s13 = sld [smem:[#allocation0]]
  $region89: #{llama_forward.1} parent=0
    _
  %s15 = ssub.s32 1, %s13
  %s16 = scalar_select 0, %s15, %s13
  $region1: #{llama_forward.1} parent=0
    #allocation3 [shape = 'u8[16384]{0}', space=vmem, size = 0x4000, scoped, tag = 'output window, operand 0']
    #allocation4 [shape = 's32[2]{0}', space=sflag, size = 0x8, scoped, tag = 'scoped memory for llama_forward.1']
    %17 = vsyncpa [#allocation4], 0
    %s18 = scalar_lea.sflag [#allocation4], 1
    %19 = vsyncpa %s18, 0
    loop: start=0, step=1, limit=6
    $region2: #{llama_forward.1} parent=1 // loop_pre_header
      _
    $region3: #{llama_forward.1} parent=1 // loop_header
      %s21 = sphi 0, %s25
      %p22 = scmp.ge.s32.totalorder %s21, 6
      %s28 = sphi 0, %s40
      %s29 = sphi 0, %s36
      %s30 = sphi 0, %s28
      %s31 = sphi 0, %s29
      %s32 = sphi 0, %s30
      %s33 = sphi 0, %s31
      %s43 = sphi 0, %s45
      %s46 = sphi 0, %s43
      %s47 = sphi 0, %s46
      %s63 = sphi 0, %s47
      %s67 = sphi 0, %s67
      %s69 = sphi 0, %s67
      %s70 = sphi 0, %s69
      %s84 = sphi 0, %s70
      %s88 = sphi 0, %s88
      %s90 = sphi 0, %s88
      %s91 = sphi 0, %s90
      %s105 = sphi 0, %s91
      %s109 = sphi 0, %s109
      %s111 = sphi 0, %s109
      %s112 = sphi 0, %s111
      %s126 = sphi 0, %s112
      %s132 = sphi 0, %s134
      %s135 = sphi 0, %s132
      %s136 = sphi 0, %s135
      %s152 = sphi 0, %s136
      %s158 = sphi 0, %s160
      %s161 = sphi 0, %s158
      %s162 = sphi 0, %s161
      %s178 = sphi 0, %s162
      %s184 = sphi 0, %s186
      %s187 = sphi 0, %s184
      %s188 = sphi 0, %s187
      %s204 = sphi 0, %s188
      %s210 = sphi 0, %s212
      %s213 = sphi 0, %s210
      %s214 = sphi 0, %s213
      %s230 = sphi 0, %s214
      %s236 = sphi 0, %s238
      %s239 = sphi 0, %s236
      %s240 = sphi 0, %s239
      %s256 = sphi 0, %s240
      %s262 = sphi 0, %s264
      %s265 = sphi 0, %s262
      %s266 = sphi 0, %s265
      %s282 = sphi 0, %s266
      %s286 = sphi 0, %s286
      %s288 = sphi 0, %s286
      %s289 = sphi 0, %s288
      %s303 = sphi 0, %s289
      %s307 = sphi 0, %s307
      %s309 = sphi 0, %s307
      %s310 = sphi 0, %s309
      %s324 = sphi 0, %s310
      %s330 = sphi 0, %s332
      %s333 = sphi 0, %s330
      %s334 = sphi 0, %s333
      %s350 = sphi 0, %s334
    $region4: #{llama_forward.1} parent=1 // loop_header_branch
      %24 = sbr.rel (%p22) target = $region8
    $region5: #{llama_forward.1} parent=1 // loop_body
      %s26 = ssub.s32 %s21, 1
      %s27 = ssub.s32 %s21, 2
      %s34 = sadd.s32 1, %s29
      %p35 = scmp.ge.s32.totalorder %s34, 2
      %s36 = scalar_select %p35, 0, %s34
      %s37 = sadd.s32 1, %s28
      %s38 = scalar_select %p35, %s37, %s28
      %p39 = scmp.ge.s32.totalorder %s38, 2
      %s40 = scalar_select %p39, 0, %s38
      %s41 = ssub.s32 %s28, %s40
      %p42 = scmp.eq.s32.totalorder %s41, 0
      %s44 = sadd.s32 %s43, 1
      %s45 = scalar_select %p42, %s43, %s44
      %p48 = pneg %p42
      %p49 = scmp.eq.s32.totalorder %s21, 3
      %p50 = por %p48, %p49
      %p51 = scmp.ne.s32.totalorder %s43, %s46
      %p52 = scmp.eq.s32.totalorder %s21, 0
      %p53 = por %p51, %p52
      %p54 = scmp.ne.s32.totalorder %s43, %s46
      %p55 = scmp.eq.s32.totalorder %s26, 3
      %p56 = por %p54, %p55
      %p57 = scmp.ne.s32.totalorder %s46, %s47
      %p58 = scmp.eq.s32.totalorder %s26, 0
      %p59 = por %p57, %p58
      %p60 = scmp.ne.s32.totalorder %s46, %s47
      %p61 = scmp.eq.s32.totalorder %s27, 3
      %p62 = por %p60, %p61
      %p64 = scmp.ne.s32.totalorder %s47, %s63
      %p65 = scmp.eq.s32.totalorder %s27, 0
      %p66 = por %p64, %p65
      %s68 = sadd.s32 %s67, 1
      %p71 = scmp.eq.s32.totalorder %s21, 3
      %p72 = scmp.ne.s32.totalorder %s67, %s69
      %p73 = scmp.eq.s32.totalorder %s21, 0
      %p74 = por %p72, %p73
      %p75 = scmp.ne.s32.totalorder %s67, %s69
      %p76 = scmp.eq.s32.totalorder %s26, 3
      %p77 = por %p75, %p76
      %p78 = scmp.ne.s32.totalorder %s69, %s70
      %p79 = scmp.eq.s32.totalorder %s26, 0
      %p80 = por %p78, %p79
      %p81 = scmp.ne.s32.totalorder %s69, %s70
      %p82 = scmp.eq.s32.totalorder %s27, 3
      %p83 = por %p81, %p82
      %p85 = scmp.ne.s32.totalorder %s70, %s84
      %p86 = scmp.eq.s32.totalorder %s27, 0
      %p87 = por %p85, %p86
      %s89 = sadd.s32 %s88, 1
      %p92 = scmp.eq.s32.totalorder %s21, 3
      %p93 = scmp.ne.s32.totalorder %s88, %s90
      %p94 = scmp.eq.s32.totalorder %s21, 0
      %p95 = por %p93, %p94
      %p96 = scmp.ne.s32.totalorder %s88, %s90
      %p97 = scmp.eq.s32.totalorder %s26, 3
      %p98 = por %p96, %p97
      %p99 = scmp.ne.s32.totalorder %s90, %s91
      %p100 = scmp.eq.s32.totalorder %s26, 0
      %p101 = por %p99, %p100
      %p102 = scmp.ne.s32.totalorder %s90, %s91
      %p103 = scmp.eq.s32.totalorder %s27, 3
      %p104 = por %p102, %p103
      %p106 = scmp.ne.s32.totalorder %s91, %s105
      %p107 = scmp.eq.s32.totalorder %s27, 0
      %p108 = por %p106, %p107
      %s110 = sadd.s32 %s109, 1
      %p113 = scmp.eq.s32.totalorder %s21, 3
      %p114 = scmp.ne.s32.totalorder %s109, %s111
      %p115 = scmp.eq.s32.totalorder %s21, 0
      %p116 = por %p114, %p115
      %p117 = scmp.ne.s32.totalorder %s109, %s111
      %p118 = scmp.eq.s32.totalorder %s26, 3
      %p119 = por %p117, %p118
      %p120 = scmp.ne.s32.totalorder %s111, %s112
      %p121 = scmp.eq.s32.totalorder %s26, 0
      %p122 = por %p120, %p121
      %p123 = scmp.ne.s32.totalorder %s111, %s112
      %p124 = scmp.eq.s32.totalorder %s27, 3
      %p125 = por %p123, %p124
      %p127 = scmp.ne.s32.totalorder %s112, %s126
      %p128 = scmp.eq.s32.totalorder %s27, 0
      %p129 = por %p127, %p128
      %s130 = ssub.s32 %s29, %s36
      %p131 = scmp.eq.s32.totalorder %s130, 0
      %s133 = sadd.s32 %s132, 1
      %s134 = scalar_select %p131, %s132, %s133
      %p137 = pneg %p131
      %p138 = scmp.eq.s32.totalorder %s21, 3
      %p139 = por %p137, %p138
      %p140 = scmp.ne.s32.totalorder %s132, %s135
      %p141 = scmp.eq.s32.totalorder %s21, 0
      %p142 = por %p140, %p141
      %p143 = scmp.ne.s32.totalorder %s132, %s135
      %p144 = scmp.eq.s32.totalorder %s26, 3
      %p145 = por %p143, %p144
      %p146 = scmp.ne.s32.totalorder %s135, %s136
      %p147 = scmp.eq.s32.totalorder %s26, 0
      %p148 = por %p146, %p147
      %p149 = scmp.ne.s32.totalorder %s135, %s136
      %p150 = scmp.eq.s32.totalorder %s27, 3
      %p151 = por %p149, %p150
      %p153 = scmp.ne.s32.totalorder %s136, %s152
      %p154 = scmp.eq.s32.totalorder %s27, 0
      %p155 = por %p153, %p154
      %s156 = ssub.s32 %s29, %s36
      %p157 = scmp.eq.s32.totalorder %s156, 0
      %s159 = sadd.s32 %s158, 1
      %s160 = scalar_select %p157, %s158, %s159
      %p163 = pneg %p157
      %p164 = scmp.eq.s32.totalorder %s21, 3
      %p165 = por %p163, %p164
      %p166 = scmp.ne.s32.totalorder %s158, %s161
      %p167 = scmp.eq.s32.totalorder %s21, 0
      %p168 = por %p166, %p167
      %p169 = scmp.ne.s32.totalorder %s158, %s161
      %p170 = scmp.eq.s32.totalorder %s26, 3
      %p171 = por %p169, %p170
      %p172 = scmp.ne.s32.totalorder %s161, %s162
      %p173 = scmp.eq.s32.totalorder %s26, 0
      %p174 = por %p172, %p173
      %p175 = scmp.ne.s32.totalorder %s161, %s162
      %p176 = scmp.eq.s32.totalorder %s27, 3
      %p177 = por %p175, %p176
      %p179 = scmp.ne.s32.totalorder %s162, %s178
      %p180 = scmp.eq.s32.totalorder %s27, 0
      %p181 = por %p179, %p180
      %s182 = ssub.s32 %s29, %s36
      %p183 = scmp.eq.s32.totalorder %s182, 0
      %s185 = sadd.s32 %s184, 1
      %s186 = scalar_select %p183, %s184, %s185
      %p189 = pneg %p183
      %p190 = scmp.eq.s32.totalorder %s21, 3
      %p191 = por %p189, %p190
      %p192 = scmp.ne.s32.totalorder %s184, %s187
      %p193 = scmp.eq.s32.totalorder %s21, 0
      %p194 = por %p192, %p193
      %p195 = scmp.ne.s32.totalorder %s184, %s187
      %p196 = scmp.eq.s32.totalorder %s26, 3
      %p197 = por %p195, %p196
      %p198 = scmp.ne.s32.totalorder %s187, %s188
      %p199 = scmp.eq.s32.totalorder %s26, 0
      %p200 = por %p198, %p199
      %p201 = scmp.ne.s32.totalorder %s187, %s188
      %p202 = scmp.eq.s32.totalorder %s27, 3
      %p203 = por %p201, %p202
      %p205 = scmp.ne.s32.totalorder %s188, %s204
      %p206 = scmp.eq.s32.totalorder %s27, 0
      %p207 = por %p205, %p206
      %s208 = ssub.s32 %s29, %s36
      %p209 = scmp.eq.s32.totalorder %s208, 0
      %s211 = sadd.s32 %s210, 1
      %s212 = scalar_select %p209, %s210, %s211
      %p215 = pneg %p209
      %p216 = scmp.eq.s32.totalorder %s21, 3
      %p217 = por %p215, %p216
      %p218 = scmp.ne.s32.totalorder %s210, %s213
      %p219 = scmp.eq.s32.totalorder %s21, 0
      %p220 = por %p218, %p219
      %p221 = scmp.ne.s32.totalorder %s210, %s213
      %p222 = scmp.eq.s32.totalorder %s26, 3
      %p223 = por %p221, %p222
      %p224 = scmp.ne.s32.totalorder %s213, %s214
      %p225 = scmp.eq.s32.totalorder %s26, 0
      %p226 = por %p224, %p225
      %p227 = scmp.ne.s32.totalorder %s213, %s214
      %p228 = scmp.eq.s32.totalorder %s27, 3
      %p229 = por %p227, %p228
      %p231 = scmp.ne.s32.totalorder %s214, %s230
      %p232 = scmp.eq.s32.totalorder %s27, 0
      %p233 = por %p231, %p232
      %s234 = ssub.s32 %s29, %s36
      %p235 = scmp.eq.s32.totalorder %s234, 0
      %s237 = sadd.s32 %s236, 1
      %s238 = scalar_select %p235, %s236, %s237
      %p241 = pneg %p235
      %p242 = scmp.eq.s32.totalorder %s21, 3
      %p243 = por %p241, %p242
      %p244 = scmp.ne.s32.totalorder %s236, %s239
      %p245 = scmp.eq.s32.totalorder %s21, 0
      %p246 = por %p244, %p245
      %p247 = scmp.ne.s32.totalorder %s236, %s239
      %p248 = scmp.eq.s32.totalorder %s26, 3
      %p249 = por %p247, %p248
      %p250 = scmp.ne.s32.totalorder %s239, %s240
      %p251 = scmp.eq.s32.totalorder %s26, 0
      %p252 = por %p250, %p251
      %p253 = scmp.ne.s32.totalorder %s239, %s240
      %p254 = scmp.eq.s32.totalorder %s27, 3
      %p255 = por %p253, %p254
      %p257 = scmp.ne.s32.totalorder %s240, %s256
      %p258 = scmp.eq.s32.totalorder %s27, 0
      %p259 = por %p257, %p258
      %s260 = ssub.s32 %s29, %s36
      %p261 = scmp.eq.s32.totalorder %s260, 0
      %s263 = sadd.s32 %s262, 1
      %s264 = scalar_select %p261, %s262, %s263
      %p267 = pneg %p261
      %p268 = scmp.eq.s32.totalorder %s21, 3
      %p269 = por %p267, %p268
      %p270 = scmp.ne.s32.totalorder %s262, %s265
      %p271 = scmp.eq.s32.totalorder %s21, 0
      %p272 = por %p270, %p271
      %p273 = scmp.ne.s32.totalorder %s262, %s265
      %p274 = scmp.eq.s32.totalorder %s26, 3
      %p275 = por %p273, %p274
      %p276 = scmp.ne.s32.totalorder %s265, %s266
      %p277 = scmp.eq.s32.totalorder %s26, 0
      %p278 = por %p276, %p277
      %p279 = scmp.ne.s32.totalorder %s265, %s266
      %p280 = scmp.eq.s32.totalorder %s27, 3
      %p281 = por %p279, %p280
      %p283 = scmp.ne.s32.totalorder %s266, %s282
      %p284 = scmp.eq.s32.totalorder %s27, 0
      %p285 = por %p283, %p284
      %s287 = sadd.s32 %s286, 1
      %p290 = scmp.eq.s32.totalorder %s21, 3
      %p291 = scmp.ne.s32.totalorder %s286, %s288
      %p292 = scmp.eq.s32.totalorder %s21, 0
      %p293 = por %p291, %p292
      %p294 = scmp.ne.s32.totalorder %s286, %s288
      %p295 = scmp.eq.s32.totalorder %s26, 3
      %p296 = por %p294, %p295
      %p297 = scmp.ne.s32.totalorder %s288, %s289
      %p298 = scmp.eq.s32.totalorder %s26, 0
      %p299 = por %p297, %p298
      %p300 = scmp.ne.s32.totalorder %s288, %s289
      %p301 = scmp.eq.s32.totalorder %s27, 3
      %p302 = por %p300, %p301
      %p304 = scmp.ne.s32.totalorder %s289, %s303
      %p305 = scmp.eq.s32.totalorder %s27, 0
      %p306 = por %p304, %p305
      %s308 = sadd.s32 %s307, 1
      %p311 = scmp.eq.s32.totalorder %s21, 3
      %p312 = scmp.ne.s32.totalorder %s307, %s309
      %p313 = scmp.eq.s32.totalorder %s21, 0
      %p314 = por %p312, %p313
      %p315 = scmp.ne.s32.totalorder %s307, %s309
      %p316 = scmp.eq.s32.totalorder %s26, 3
      %p317 = por %p315, %p316
      %p318 = scmp.ne.s32.totalorder %s309, %s310
      %p319 = scmp.eq.s32.totalorder %s26, 0
      %p320 = por %p318, %p319
      %p321 = scmp.ne.s32.totalorder %s309, %s310
      %p322 = scmp.eq.s32.totalorder %s27, 3
      %p323 = por %p321, %p322
      %p325 = scmp.ne.s32.totalorder %s310, %s324
      %p326 = scmp.eq.s32.totalorder %s27, 0
      %p327 = por %p325, %p326
      %s328 = ssub.s32 %s28, %s40
      %p329 = scmp.eq.s32.totalorder %s328, 0
      %s331 = sadd.s32 %s330, 1
      %s332 = scalar_select %p329, %s330, %s331
      %p335 = pneg %p329
      %p336 = scmp.eq.s32.totalorder %s21, 3
      %p337 = por %p335, %p336
      %p338 = scmp.ne.s32.totalorder %s330, %s333
      %p339 = scmp.eq.s32.totalorder %s21, 0
      %p340 = por %p338, %p339
      %p341 = scmp.ne.s32.totalorder %s330, %s333
      %p342 = scmp.eq.s32.totalorder %s26, 3
      %p343 = por %p341, %p342
      %p344 = scmp.ne.s32.totalorder %s333, %s334
      %p345 = scmp.eq.s32.totalorder %s26, 0
      %p346 = por %p344, %p345
      %p347 = scmp.ne.s32.totalorder %s333, %s334
      %p348 = scmp.eq.s32.totalorder %s27, 3
      %p349 = por %p347, %p348
      %p351 = scmp.ne.s32.totalorder %s334, %s350
      %p352 = scmp.eq.s32.totalorder %s27, 0
      %p353 = por %p351, %p352
      %p354 = scmp.le.s32.totalorder 1, %s21
      %p355 = scmp.lt.s32.totalorder %s21, 5
      %p356 = pnand %p354, %p355
      %p357 = pneg %p356
      // Predicated region
      $region9: #{llama_forward.1} parent=5 // pred_check
        _
      $region10: #{llama_forward.1} parent=5 // pred_check_branch
        %359 = sbr.rel (%p356) target = $region12
      $region11: #{llama_forward.1} parent=5 // pred_region
        %s360 = ssub.s32 %s21, 1
        // Predicated region
        $region13: #{llama_forward.1} parent=11 // pred_check
          %p361 = pneg %p80
        $region14: #{llama_forward.1} parent=11 // pred_check_branch
          %363 = sbr.rel (%p361) target = $region16
        $region15: #{llama_forward.1} parent=11 // pred_region
          _
        $region16: #{llama_forward.1} parent=11 // pred_fallthru
          _
        // Predicated region
        $region17: #{llama_forward.1} parent=11 // pred_check
          %p364 = pneg %p101
        $region18: #{llama_forward.1} parent=11 // pred_check_branch
          %366 = sbr.rel (%p364) target = $region20
        $region19: #{llama_forward.1} parent=11 // pred_region
          _
        $region20: #{llama_forward.1} parent=11 // pred_fallthru
          _
        // Predicated region
        $region21: #{llama_forward.1} parent=11 // pred_check
          %p367 = pneg %p122
        $region22: #{llama_forward.1} parent=11 // pred_check_branch
          %369 = sbr.rel (%p367) target = $region24
        $region23: #{llama_forward.1} parent=11 // pred_region
          _
        $region24: #{llama_forward.1} parent=11 // pred_fallthru
          _
        // Predicated region
        $region25: #{llama_forward.1} parent=11 // pred_check
          %p370 = pneg %p299
        $region26: #{llama_forward.1} parent=11 // pred_check_branch
          %372 = sbr.rel (%p370) target = $region28
        $region27: #{llama_forward.1} parent=11 // pred_region
          _
        $region28: #{llama_forward.1} parent=11 // pred_fallthru
          _
        // Predicated region
        $region29: #{llama_forward.1} parent=11 // pred_check
          %p373 = pneg %p320
        $region30: #{llama_forward.1} parent=11 // pred_check_branch
          %375 = sbr.rel (%p373) target = $region32
        $region31: #{llama_forward.1} parent=11 // pred_region
          _
        $region32: #{llama_forward.1} parent=11 // pred_fallthru
          _
      $region12: #{llama_forward.1} parent=5 // pred_fallthru
        _
      %p376 = scmp.lt.s32.totalorder %s21, 4
      // Predicated region
      $region33: #{llama_forward.1} parent=5 // pred_check
        %p377 = pneg %p376
      $region34: #{llama_forward.1} parent=5 // pred_check_branch
        %379 = sbr.rel (%p377) target = $region36
      $region35: #{llama_forward.1} parent=5 // pred_region
        // Predicated region
        $region37: #{llama_forward.1} parent=35 // pred_check
          %p380 = pneg %p53
        $region38: #{llama_forward.1} parent=35 // pred_check_branch
          %382 = sbr.rel (%p380) target = $region40
        $region39: #{llama_forward.1} parent=35 // pred_region
          %p383 = scmp.lt.s32.totalorder %s28, 1
          %s384 = scalar_select %p383, %s28, 1
          %s385 = smul.addr %s384, 8
          %s386 = scalar_lea.vmem %s0, %s385
        $region40: #{llama_forward.1} parent=35 // pred_fallthru
          _
        // Predicated region
        $region41: #{llama_forward.1} parent=35 // pred_check
          %p387 = pneg %p142
        $region42: #{llama_forward.1} parent=35 // pred_check_branch
          %389 = sbr.rel (%p387) target = $region44
        $region43: #{llama_forward.1} parent=35 // pred_region
          %p390 = scmp.lt.s32.totalorder %s29, 1
          %s391 = scalar_select %p390, %s29, 1
          %s392 = scalar_lea.vmem %s4, %s391
        $region44: #{llama_forward.1} parent=35 // pred_fallthru
          _
        // Predicated region
        $region45: #{llama_forward.1} parent=35 // pred_check
          %p393 = pneg %p168
        $region46: #{llama_forward.1} parent=35 // pred_check_branch
          %395 = sbr.rel (%p393) target = $region48
        $region47: #{llama_forward.1} parent=35 // pred_region
          %p396 = scmp.lt.s32.totalorder %s29, 1
          %s397 = scalar_select %p396, %s29, 1
          %s398 = smul.addr %s397, 24
          %s399 = smul.addr %s398, 4
          %s400 = scalar_lea.vmem %s5, %s399
        $region48: #{llama_forward.1} parent=35 // pred_fallthru
          _
        // Predicated region
        $region49: #{llama_forward.1} parent=35 // pred_check
          %p401 = pneg %p194
        $region50: #{llama_forward.1} parent=35 // pred_check_branch
          %403 = sbr.rel (%p401) target = $region52
        $region51: #{llama_forward.1} parent=35 // pred_region
          %p404 = scmp.lt.s32.totalorder %s29, 1
          %s405 = scalar_select %p404, %s29, 1
          %s406 = smul.addr %s405, 8
          %s407 = smul.addr %s406, 4
          %s408 = scalar_lea.vmem %s6, %s407
        $region52: #{llama_forward.1} parent=35 // pred_fallthru
          _
        // Predicated region
        $region53: #{llama_forward.1} parent=35 // pred_check
          %p409 = pneg %p220
        $region54: #{llama_forward.1} parent=35 // pred_check_branch
          %411 = sbr.rel (%p409) target = $region56
        $region55: #{llama_forward.1} parent=35 // pred_region
          %p412 = scmp.lt.s32.totalorder %s29, 1
          %s413 = scalar_select %p412, %s29, 1
          %s414 = scalar_lea.vmem %s7, %s413
        $region56: #{llama_forward.1} parent=35 // pred_fallthru
          _
        // Predicated region
        $region57: #{llama_forward.1} parent=35 // pred_check
          %p415 = pneg %p246
        $region58: #{llama_forward.1} parent=35 // pred_check_branch
          %417 = sbr.rel (%p415) target = $region60
        $region59: #{llama_forward.1} parent=35 // pred_region
          %p418 = scmp.lt.s32.totalorder %s29, 1
          %s419 = scalar_select %p418, %s29, 1
          %s420 = smul.addr %s419, 24
          %s421 = smul.addr %s420, 4
          %s422 = scalar_lea.vmem %s8, %s421
        $region60: #{llama_forward.1} parent=35 // pred_fallthru
          _
        // Predicated region
        $region61: #{llama_forward.1} parent=35 // pred_check
          %p423 = pneg %p272
        $region62: #{llama_forward.1} parent=35 // pred_check_branch
          %425 = sbr.rel (%p423) target = $region64
        $region63: #{llama_forward.1} parent=35 // pred_region
          %p426 = scmp.lt.s32.totalorder %s29, 1
          %s427 = scalar_select %p426, %s29, 1
          %s428 = smul.addr %s427, 24
          %s429 = smul.addr %s428, 4
          %s430 = scalar_lea.vmem %s9, %s429
        $region64: #{llama_forward.1} parent=35 // pred_fallthru
          _
      $region36: #{llama_forward.1} parent=5 // pred_fallthru
        _
      %p431 = scmp.le.s32.totalorder 1, %s21
      %p432 = scmp.lt.s32.totalorder %s21, 5
      %p433 = pnand %p431, %p432
      %p434 = pneg %p433
      // Predicated region
      $region65: #{llama_forward.1} parent=5 // pred_check
        _
      $region66: #{llama_forward.1} parent=5 // pred_check_branch
        %436 = sbr.rel (%p433) target = $region68
      $region67: #{llama_forward.1} parent=5 // pred_region
        %s437 = ssub.s32 %s21, 1
        %p438 = scmp.lt.s32.totalorder %s30, 1
        %s439 = scalar_select %p438, %s30, 1
        %s440 = smul.addr %s439, 8
        %s441 = scalar_lea.vmem %s0, %s440
        %p442 = pneg %p59
        %p443 = pneg %p56
        %p444 = pneg %p80
        %p445 = pneg %p77
        %p446 = pneg %p101
        %p447 = pneg %p98
        %p448 = pneg %p122
        %p449 = pneg %p119
        %p450 = scmp.lt.s32.totalorder %s31, 1
        %s451 = scalar_select %p450, %s31, 1
        %s452 = scalar_lea.vmem %s4, %s451
        %p453 = pneg %p148
        %p454 = pneg %p145
        %p455 = scmp.lt.s32.totalorder %s31, 1
        %s456 = scalar_select %p455, %s31, 1
        %s457 = smul.addr %s456, 24
        %s458 = smul.addr %s457, 4
        %s459 = scalar_lea.vmem %s5, %s458
        %p460 = pneg %p174
        %p461 = pneg %p171
        %p462 = scmp.lt.s32.totalorder %s31, 1
        %s463 = scalar_select %p462, %s31, 1
        %s464 = smul.addr %s463, 8
        %s465 = smul.addr %s464, 4
        %s466 = scalar_lea.vmem %s6, %s465
        %p467 = pneg %p200
        %p468 = pneg %p197
        %p469 = scmp.lt.s32.totalorder %s31, 1
        %s470 = scalar_select %p469, %s31, 1
        %s471 = scalar_lea.vmem %s7, %s470
        %p472 = pneg %p226
        %p473 = pneg %p223
        %p474 = scmp.lt.s32.totalorder %s31, 1
        %s475 = scalar_select %p474, %s31, 1
        %s476 = smul.addr %s475, 24
        %s477 = smul.addr %s476, 4
        %s478 = scalar_lea.vmem %s8, %s477
        %p479 = pneg %p252
        %p480 = pneg %p249
        %p481 = scmp.lt.s32.totalorder %s31, 1
        %s482 = scalar_select %p481, %s31, 1
        %s483 = smul.addr %s482, 24
        %s484 = smul.addr %s483, 4
        %s485 = scalar_lea.vmem %s9, %s484
        %p486 = pneg %p278
        %p487 = pneg %p275
        %p488 = pneg %p299
        %p489 = pneg %p296
        %p490 = pneg %p320
        %p491 = pneg %p317
        %p492 = pneg %p346
        %p493 = pneg %p343
        %s494 = sand.u32 %s333, 1
        %s495 = scalar_lea.sflag [#allocation4], %s494
        %s496 = sand.u32 %s333, 1
        %s497 = smul.addr %s496, 16
        %s498 = scalar_lea.vmem [#allocation3], %s497
        %p499 = scmp.lt.s32.totalorder %s30, 1
        %s500 = scalar_select %p499, %s30, 1
        %s501 = smul.addr %s500, 8
        %s502 = scalar_lea.vmem %s0, %s501
        %p503 = scmp.lt.s32.totalorder %s31, 1
        %s504 = scalar_select %p503, %s31, 1
        %s505 = scalar_lea.vmem %s4, %s504
        %p506 = scmp.lt.s32.totalorder %s31, 1
        %s507 = scalar_select %p506, %s31, 1
        %s508 = smul.addr %s507, 24
        %s509 = smul.addr %s508, 4
        %s510 = scalar_lea.vmem %s5, %s509
        %p511 = scmp.lt.s32.totalorder %s31, 1
        %s512 = scalar_select %p511, %s31, 1
        %s513 = smul.addr %s512, 8
        %s514 = smul.addr %s513, 4
        %s515 = scalar_lea.vmem %s6, %s514
        %p516 = scmp.lt.s32.totalorder %s31, 1
        %s517 = scalar_select %p516, %s31, 1
        %s518 = scalar_lea.vmem %s7, %s517
        %p519 = scmp.lt.s32.totalorder %s31, 1
        %s520 = scalar_select %p519, %s31, 1
        %s521 = smul.addr %s520, 24
        %s522 = smul.addr %s521, 4
        %s523 = scalar_lea.vmem %s8, %s522
        %p524 = scmp.lt.s32.totalorder %s31, 1
        %s525 = scalar_select %p524, %s31, 1
        %s526 = smul.addr %s525, 24
        %s527 = smul.addr %s526, 4
        %s528 = scalar_lea.vmem %s9, %s527
        %p530 = scmp.eq.s32.totalorder %s31, 0
        // Predicated region
        $region69: #{llama_forward.1} parent=67 // pred_check
          %p531 = pneg %p530
        $region70: #{llama_forward.1} parent=67 // pred_check_branch
          %533 = sbr.rel (%p531) target = $region72
        $region71: #{llama_forward.1} parent=67 // pred_region
          %v534 = vld [vmem:[%s502] sm:$0xff]
          %vm535 = vcmask 523264
          %536 = vst.msk [vmem:[#allocation2] sm:$0xff] %vm535, %v534
        $region72: #{llama_forward.1} parent=67 // pred_fallthru
          _
        %v537 = vld [vmem:[#allocation2] sm:$0xff]
        %v538 = vld [vmem:[%s1] sm:$0xff]
        %540 = vrot.lane.b32.xlu0 %v538, 16
        %v541 = vpop.permute.xlu0 %540
        %543 = vrot.lane.b32.xlu0 %v538, 32
        %v544 = vpop.permute.xlu0 %543
        %546 = vrot.lane.b32.xlu0 %v538, 48
        %v547 = vpop.permute.xlu0 %546
        %vm549 = vcmask 130048
        %v550 = vsel %vm549, %v538, %v541
        %vm551 = vcmask 261120
        %v552 = vsel %vm551, %v550, %v544
        %vm553 = vcmask 392192
        %v554 = vsel %vm553, %v552, %v547
        %v555 = vld [vmem:[%s2] sm:$0xff]
        %557 = vrot.lane.b32.xlu0 %v555, 16
        %v558 = vpop.permute.xlu0 %557
        %560 = vrot.lane.b32.xlu0 %v555, 32
        %v561 = vpop.permute.xlu0 %560
        %563 = vrot.lane.b32.xlu0 %v555, 48
        %v564 = vpop.permute.xlu0 %563
        %v566 = vsel %vm549, %v555, %v558
        %v567 = vsel %vm551, %v566, %v561
        %v568 = vsel %vm553, %v567, %v564
        %v569 = vmul.f32 %v537, %v537
        %vm570 = vcmask 523264
        %v571 = vsel %vm570, %v569, 0.0
        %572 = vadd.xlane.f32.xlu0 %v571
        %v573 = vpop.xlane.xlu0 %572
        %v574 = vrcp.pop 64.0
        %v575 = vmul.f32 64.0, %v574
        %v576 = vsub.f32 1.0, %v575
        %v577 = vmul.f32 %v574, %v576
        %v578 = vadd.f32 %v574, %v577
        %vm579 = vweird.f32 %v574
        %v580 = vsel %vm579, %v574, %v578
        %v581 = vmul.f32 %v573, %v580
        %v582 = vadd.f32 %v581, 1e-05
        %v583 = vrsqrt.pop %v582
        %v584 = vmul.f32 %v583, %v582
        %v585 = vmul.f32 %v584, %v583
        %v586 = vmul.f32 0.5, %v585
        %v587 = vsub.f32 1.5, %v586
        %v588 = vmul.f32 %v583, %v587
        %vm589 = vweird.f32 %v582
        %vm590 = vweird.f32 %v583
        %vm591 = vmor %vm589, %vm590
        %v592 = vsel %vm591, %v583, %v588
        %v593 = vmul.f32 %v537, %v592
        %v594 = vld [vmem:[%s505] sm:$0x1]
        %v596 = vperm.slane %v594, 0
        %v598 = vmul.f32 %v593, %v596
        %v599 = vpack.c.bf16 %v598, %v598
        %v600 = vld [vmem:[%s510] sm:$0xff]
        %v601 = vld [vmem:[%s510 + $0x8] sm:$0xf]
        %v602 = vld [vmem:[%s510 + $0xc] sm:$0xff]
        %v603 = vld [vmem:[%s510 + $0x14] sm:$0xf]
        %v604 = vld [vmem:[%s510 + $0x18] sm:$0xff]
        %v605 = vld [vmem:[%s510 + $0x20] sm:$0xf]
        %v606 = vld [vmem:[%s510 + $0x24] sm:$0xff]
        %v607 = vld [vmem:[%s510 + $0x2c] sm:$0xf]
        %v608 = vld [vmem:[%s510 + $0x30] sm:$0xff]
        %v609 = vld [vmem:[%s510 + $0x38] sm:$0xf]
        %v610 = vld [vmem:[%s510 + $0x3c] sm:$0xff]
        %v611 = vld [vmem:[%s510 + $0x44] sm:$0xf]
        %v612 = vld [vmem:[%s510 + $0x48] sm:$0xff]
        %v613 = vld [vmem:[%s510 + $0x50] sm:$0xf]
        %v614 = vld [vmem:[%s510 + $0x54] sm:$0xff]
        %v615 = vld [vmem:[%s510 + $0x5c] sm:$0xf]
        %v632 = vunpack.c.l.b16 %v600
        %v633 = vunpack.c.h.b16 %v600
        %v634 = vunpack.c.l.b16 %v601
        %v635 = vunpack.c.l.b16 %v602
        %v636 = vunpack.c.h.b16 %v602
        %v637 = vunpack.c.l.b16 %v603
        %v638 = vunpack.c.l.b16 %v604
        %v639 = vunpack.c.h.b16 %v604
        %v640 = vunpack.c.l.b16 %v605
        %v641 = vunpack.c.l.b16 %v606
        %v642 = vunpack.c.h.b16 %v606
        %v643 = vunpack.c.l.b16 %v607
        %v644 = vunpack.c.l.b16 %v608
        %v645 = vunpack.c.h.b16 %v608
        %v646 = vunpack.c.l.b16 %v609
        %v647 = vunpack.c.l.b16 %v610
        %v648 = vunpack.c.h.b16 %v610
        %v649 = vunpack.c.l.b16 %v611
        %v650 = vunpack.c.l.b16 %v612
        %v651 = vunpack.c.h.b16 %v612
        %v652 = vunpack.c.l.b16 %v613
        %v653 = vunpack.c.l.b16 %v614
        %v654 = vunpack.c.h.b16 %v614
        %v655 = vunpack.c.l.b16 %v615
        %v656 = vpack.c.b16 %v635, %v632
        %v657 = vpack.c.b16 %v636, %v633
        %v658 = vpack.c.b16 %v637, %v634
        %v659 = vpack.c.b16 %v641, %v638
        %v660 = vpack.c.b16 %v642, %v639
        %v661 = vpack.c.b16 %v643, %v640
        %v662 = vpack.c.b16 %v647, %v644
        %v663 = vpack.c.b16 %v648, %v645
        %v664 = vpack.c.b16 %v649, %v646
        %v665 = vpack.c.b16 %v653, %v650
        %v666 = vpack.c.b16 %v654, %v651
        %v667 = vpack.c.b16 %v655, %v652
        %v681 = vsel %vm570, %v599, 0
        %683 = vmatpush.bf16.msra.mxu0 0
        %684 = vmatpush.bf16.msra.mxu0 0
        %685 = vmatpush.bf16.msra.mxu0 0
        %686 = vmatpush.bf16.msra.mxu0 0
        %687 = vmatpush.bf16.msra.mxu0 %v665
        %688 = vmatpush.bf16.msra.mxu0 %v662
        %689 = vmatpush.bf16.msra.mxu0 %v659
        %690 = vmatpush.bf16.msra.mxu0 %v656
        %691 = vmatmul.bf16.gmra.mxu0 %v681
        %v692 = vpop.f32.mrf.mxu0
        %v693 = vadd.f32 0.0, %v692
        %v694 = vpop.f32.mrf.mxu0
        %695 = vdwg.mxu0
        %696 = vmatpush.bf16.msra.mxu0 0
        %697 = vmatpush.bf16.msra.mxu0 0
        %698 = vmatpush.bf16.msra.mxu0 0
        %699 = vmatpush.bf16.msra.mxu0 0
        %700 = vmatpush.bf16.msra.mxu0 %v666
        %701 = vmatpush.bf16.msra.mxu0 %v663
        %702 = vmatpush.bf16.msra.mxu0 %v660
        %703 = vmatpush.bf16.msra.mxu0 %v657
        %704 = vmatmul.bf16.gmra.mxu0 %v681
        %v705 = vpop.f32.mrf.mxu0
        %v706 = vadd.f32 0.0, %v705
        %v707 = vpop.f32.mrf.mxu0
        %708 = vdwg.mxu0
        %709 = vmatpush.bf16.msra.mxu0 0
        %710 = vmatpush.bf16.msra.mxu0 0
        %711 = vmatpush.bf16.msra.mxu0 0
        %712 = vmatpush.bf16.msra.mxu0 0
        %713 = vmatpush.bf16.msra.mxu0 %v667
        %714 = vmatpush.bf16.msra.mxu0 %v664
        %715 = vmatpush.bf16.msra.mxu0 %v661
        %716 = vmatpush.bf16.msra.mxu0 %v658
        %717 = vmatmul.bf16.gmra.mxu0 %v681
        %v718 = vpop.f32.mrf.mxu0
        %v719 = vadd.f32 0.0, %v718
        %v720 = vpop.f32.mrf.mxu0
        %721 = vdwg.mxu0
        %v722 = vmul.f32 %v693, %v554
        %724 = vrot.lane.b32.xlu0 %v568, 64
        %v725 = vpop.permute.xlu0 %724
        %v727 = vmul.f32 %v693, %v725
        %729 = vrot.lane.b32.xlu0 %v727, 64
        %v730 = vpop.permute.xlu0 %729
        %v732 = vadd.f32 %v722, %v730
        %v733 = vmul.f32 %v706, %v554
        %v734 = vmul.f32 %v706, %v725
        %736 = vrot.lane.b32.xlu0 %v734, 64
        %v737 = vpop.permute.xlu0 %736
        %v739 = vadd.f32 %v733, %v737
        %v740 = vpack.c.bf16 %v732, %v732
        %v741 = vpack.c.bf16 %v739, %v739
        %v742 = vpack.c.bf16 %v719, %v719
        %744 = vrot.lane.b32.xlu0 %v740, 112
        %v745 = vpop.permute.xlu0 %744
        %746 = vrot.lane.b32.xlu0 %v740, 96
        %v747 = vpop.permute.xlu0 %746
        %748 = vrot.lane.b32.xlu0 %v740, 80
        %v749 = vpop.permute.xlu0 %748
        %751 = vrot.lane.b32.xlu0 %v741, 112
        %v752 = vpop.permute.xlu0 %751
        %753 = vrot.lane.b32.xlu0 %v741, 96
        %v754 = vpop.permute.xlu0 %753
        %755 = vrot.lane.b32.xlu0 %v741, 80
        %v756 = vpop.permute.xlu0 %755
        %758 = vrot.lane.b32.xlu0 %v742, 112
        %v759 = vpop.permute.xlu0 %758
        %760 = vrot.lane.b32.xlu0 %v742, 96
        %v761 = vpop.permute.xlu0 %760
        %762 = vrot.lane.b32.xlu0 %v742, 80
        %v763 = vpop.permute.xlu0 %762
        %v764 = vld [vmem:[%s3] sm:$0xff]
        %v766 = vsel %vm549, %v740, 0
        %v769 = vsel %vm549, %v741, 0
        %771 = vmatpush.bf16.xpose.msra.mxu0 0
        %772 = vmatpush.bf16.xpose.msra.mxu0 0
        %773 = vmatpush.bf16.xpose.msra.mxu0 0
        %774 = vmatpush.bf16.xpose.msra.mxu0 0
        %775 = vmatpush.bf16.xpose.msra.mxu0 0
        %776 = vmatpush.bf16.xpose.msra.mxu0 0
        %777 = vmatpush.bf16.xpose.msra.mxu0 0
        %778 = vmatpush.bf16.xpose.msra.mxu0 %v769
        %779 = vmatmul.bf16.gmra.mxu0 %v766
        %v780 = vpop.f32.mrf.mxu0
        %v781 = vadd.f32 %v764, %v780
        %v782 = vpop.f32.mrf.mxu0
        %783 = vdwg.mxu0
        %v785 = vsel %vm549, %v745, 0
        %v788 = vsel %vm549, %v752, 0
        %790 = vmatpush.bf16.xpose.msra.mxu0 0
        %791 = vmatpush.bf16.xpose.msra.mxu0 0
        %792 = vmatpush.bf16.xpose.msra.mxu0 0
        %793 = vmatpush.bf16.xpose.msra.mxu0 0
        %794 = vmatpush.bf16.xpose.msra.mxu0 0
        %795 = vmatpush.bf16.xpose.msra.mxu0 0
        %796 = vmatpush.bf16.xpose.msra.mxu0 0
        %797 = vmatpush.bf16.xpose.msra.mxu0 %v788
        %798 = vmatmul.bf16.gmra.mxu0 %v785
        %v799 = vpop.f32.mrf.mxu0
        %v800 = vadd.f32 %v764, %v799
        %v801 = vpop.f32.mrf.mxu0
        %802 = vdwg.mxu0
        %v804 = vsel %vm549, %v747, 0
        %v807 = vsel %vm549, %v754, 0
        %809 = vmatpush.bf16.xpose.msra.mxu0 0
        %810 = vmatpush.bf16.xpose.msra.mxu0 0
        %811 = vmatpush.bf16.xpose.msra.mxu0 0
        %812 = vmatpush.bf16.xpose.msra.mxu0 0
        %813 = vmatpush.bf16.xpose.msra.mxu0 0
        %814 = vmatpush.bf16.xpose.msra.mxu0 0
        %815 = vmatpush.bf16.xpose.msra.mxu0 0
        %816 = vmatpush.bf16.xpose.msra.mxu0 %v807
        %817 = vmatmul.bf16.gmra.mxu0 %v804
        %v818 = vpop.f32.mrf.mxu0
        %v819 = vadd.f32 %v764, %v818
        %v820 = vpop.f32.mrf.mxu0
        %821 = vdwg.mxu0
        %v823 = vsel %vm549, %v749, 0
        %v826 = vsel %vm549, %v756, 0
        %828 = vmatpush.bf16.xpose.msra.mxu0 0
        %829 = vmatpush.bf16.xpose.msra.mxu0 0
        %830 = vmatpush.bf16.xpose.msra.mxu0 0
        %831 = vmatpush.bf16.xpose.msra.mxu0 0
        %832 = vmatpush.bf16.xpose.msra.mxu0 0
        %833 = vmatpush.bf16.xpose.msra.mxu0 0
        %834 = vmatpush.bf16.xpose.msra.mxu0 0
        %835 = vmatpush.bf16.xpose.msra.mxu0 %v826
        %836 = vmatmul.bf16.gmra.mxu0 %v823
        %v837 = vpop.f32.mrf.mxu0
        %v838 = vadd.f32 %v764, %v837
        %v839 = vpop.f32.mrf.mxu0
        %840 = vdwg.mxu0
        %vm841 = vcmask 64512
        %v842 = vsel %vm841, %v781, -inf
        %843 = vmax.xlane.f32.xlu0 %v842
        %v844 = vpop.xlane.xlu0 %843
        %v845 = vsel %vm841, %v800, -inf
        %846 = vmax.xlane.f32.xlu0 %v845
        %v847 = vpop.xlane.xlu0 %846
        %v848 = vsel %vm841, %v819, -inf
        %849 = vmax.xlane.f32.xlu0 %v848
        %v850 = vpop.xlane.xlu0 %849
        %v851 = vsel %vm841, %v838, -inf
        %852 = vmax.xlane.f32.xlu0 %v851
        %v853 = vpop.xlane.xlu0 %852
        %v854 = vsub.f32 %v781, %v844
        %v855 = vsub.f32 %v800, %v847
        %v856 = vsub.f32 %v819, %v850
        %v857 = vsub.f32 %v838, %v853
        %v858 = vmul.f32 %v854, 1.442695
        %v859 = vpow.pop %v858
        %v860 = vmul.f32 %v855, 1.442695
        %v861 = vpow.pop %v860
        %v862 = vmul.f32 %v856, 1.442695
        %v863 = vpow.pop %v862
        %v864 = vmul.f32 %v857, 1.442695
        %v865 = vpow.pop %v864
        %v866 = vsel %vm841, %v859, 0.0
        %867 = vadd.xlane.f32.xlu0 %v866
        %v868 = vpop.xlane.xlu0 %867
        %v869 = vsel %vm841, %v861, 0.0
        %870 = vadd.xlane.f32.xlu0 %v869
        %v871 = vpop.xlane.xlu0 %870
        %v872 = vsel %vm841, %v863, 0.0
        %873 = vadd.xlane.f32.xlu0 %v872
        %v874 = vpop.xlane.xlu0 %873
        %v875 = vsel %vm841, %v865, 0.0
        %876 = vadd.xlane.f32.xlu0 %v875
        %v877 = vpop.xlane.xlu0 %876
        %v878 = vrcp.pop %v868
        %v879 = vrcp.pop %v871
        %v880 = vrcp.pop %v874
        %v881 = vrcp.pop %v877
        %v882 = vmul.f32 %v859, %v878
        %v883 = vmul.f32 %v861, %v879
        %v884 = vmul.f32 %v863, %v880
        %v885 = vmul.f32 %v865, %v881
        %v886 = vpack.c.bf16 %v882, %v882
        %v887 = vpack.c.bf16 %v883, %v883
        %v888 = vpack.c.bf16 %v884, %v884
        %v889 = vpack.c.bf16 %v885, %v885
        %v891 = vsel %vm841, %v886, 0
        %vm893 = vcmask 1043456
        %v895 = vsel %vm893, %v742, 0
        %897 = vmatpush.bf16.msra.mxu0 0
        %898 = vmatpush.bf16.msra.mxu0 0
        %899 = vmatpush.bf16.msra.mxu0 0
        %900 = vmatpush.bf16.msra.mxu0 0
        %901 = vmatpush.bf16.msra.mxu0 0
        %902 = vmatpush.bf16.msra.mxu0 0
        %903 = vmatpush.bf16.msra.mxu0 0
        %904 = vmatpush.bf16.msra.mxu0 %v895
        %905 = vmatmul.bf16.gmra.mxu0 %v891
        %v906 = vpop.f32.mrf.mxu0
        %v907 = vadd.f32 0.0, %v906
        %v908 = vpop.f32.mrf.mxu0
        %909 = vdwg.mxu0
        %v911 = vsel %vm841, %v887, 0
        %v914 = vsel %vm893, %v759, 0
        %916 = vmatpush.bf16.msra.mxu0 0
        %917 = vmatpush.bf16.msra.mxu0 0
        %918 = vmatpush.bf16.msra.mxu0 0
        %919 = vmatpush.bf16.msra.mxu0 0
        %920 = vmatpush.bf16.msra.mxu0 0
        %921 = vmatpush.bf16.msra.mxu0 0
        %922 = vmatpush.bf16.msra.mxu0 0
        %923 = vmatpush.bf16.msra.mxu0 %v914
        %924 = vmatmul.bf16.gmra.mxu0 %v911
        %v925 = vpop.f32.mrf.mxu0
        %v926 = vadd.f32 0.0, %v925
        %v927 = vpop.f32.mrf.mxu0
        %928 = vdwg.mxu0
        %v930 = vsel %vm841, %v888, 0
        %v933 = vsel %vm893, %v761, 0
        %935 = vmatpush.bf16.msra.mxu0 0
        %936 = vmatpush.bf16.msra.mxu0 0
        %937 = vmatpush.bf16.msra.mxu0 0
        %938 = vmatpush.bf16.msra.mxu0 0
        %939 = vmatpush.bf16.msra.mxu0 0
        %940 = vmatpush.bf16.msra.mxu0 0
        %941 = vmatpush.bf16.msra.mxu0 0
        %942 = vmatpush.bf16.msra.mxu0 %v933
        %943 = vmatmul.bf16.gmra.mxu0 %v930
        %v944 = vpop.f32.mrf.mxu0
        %v945 = vadd.f32 0.0, %v944
        %v946 = vpop.f32.mrf.mxu0
        %947 = vdwg.mxu0
        %v949 = vsel %vm841, %v889, 0
        %v952 = vsel %vm893, %v763, 0
        %954 = vmatpush.bf16.msra.mxu0 0
        %955 = vmatpush.bf16.msra.mxu0 0
        %956 = vmatpush.bf16.msra.mxu0 0
        %957 = vmatpush.bf16.msra.mxu0 0
        %958 = vmatpush.bf16.msra.mxu0 0
        %959 = vmatpush.bf16.msra.mxu0 0
        %960 = vmatpush.bf16.msra.mxu0 0
        %961 = vmatpush.bf16.msra.mxu0 %v952
        %962 = vmatmul.bf16.gmra.mxu0 %v949
        %v963 = vpop.f32.mrf.mxu0
        %v964 = vadd.f32 0.0, %v963
        %v965 = vpop.f32.mrf.mxu0
        %966 = vdwg.mxu0
        %968 = vrot.lane.b32.xlu0 %v926, 16
        %v969 = vpop.permute.xlu0 %968
        %972 = vrot.lane.b32.xlu0 %v945, 32
        %v973 = vpop.permute.xlu0 %972
        %976 = vrot.lane.b32.xlu0 %v964, 48
        %v977 = vpop.permute.xlu0 %976
        %v979 = vsel %vm549, %v907, %v969
        %v980 = vsel %vm551, %v979, %v973
        %v981 = vsel %vm553, %v980, %v977
        %v982 = vpack.c.bf16 %v981, %v981
        %v983 = vld [vmem:[%s515] sm:$0xf]
        %v984 = vld [vmem:[%s515 + $0x4] sm:$0xf]
        %v985 = vld [vmem:[%s515 + $0x8] sm:$0xf]
        %v986 = vld [vmem:[%s515 + $0xc] sm:$0xf]
        %v987 = vld [vmem:[%s515 + $0x10] sm:$0xf]
        %v988 = vld [vmem:[%s515 + $0x14] sm:$0xf]
        %v989 = vld [vmem:[%s515 + $0x18] sm:$0xf]
        %v990 = vld [vmem:[%s515 + $0x1c] sm:$0xf]
        %v999 = vunpack.c.l.b16 %v983
        %v1000 = vunpack.c.l.b16 %v984
        %v1001 = vunpack.c.l.b16 %v985
        %v1002 = vunpack.c.l.b16 %v986
        %v1003 = vunpack.c.l.b16 %v987
        %v1004 = vunpack.c.l.b16 %v988
        %v1005 = vunpack.c.l.b16 %v989
        %v1006 = vunpack.c.l.b16 %v990
        %v1007 = vpack.c.b16 %v1000, %v999
        %v1008 = vpack.c.b16 %v1002, %v1001
        %v1009 = vpack.c.b16 %v1004, %v1003
        %v1010 = vpack.c.b16 %v1006, %v1005
        %v1016 = vsel %vm570, %v982, 0
        %1018 = vmatpush.bf16.msra.mxu0 0
        %1019 = vmatpush.bf16.msra.mxu0 0
        %1020 = vmatpush.bf16.msra.mxu0 0
        %1021 = vmatpush.bf16.msra.mxu0 0
        %1022 = vmatpush.bf16.msra.mxu0 %v1010
        %1023 = vmatpush.bf16.msra.mxu0 %v1009
        %1024 = vmatpush.bf16.msra.mxu0 %v1008
        %1025 = vmatpush.bf16.msra.mxu0 %v1007
        %1026 = vmatmul.bf16.gmra.mxu0 %v1016
        %v1027 = vpop.f32.mrf.mxu0
        %v1028 = vadd.f32 0.0, %v1027
        %v1029 = vpop.f32.mrf.mxu0
        %1030 = vdwg.mxu0
        %v1031 = vadd.f32 %v537, %v1028
        %v1032 = vmul.f32 %v1031, %v1031
        %v1033 = vsel %vm570, %v1032, 0.0
        %1034 = vadd.xlane.f32.xlu0 %v1033
        %v1035 = vpop.xlane.xlu0 %1034
        %v1036 = vmul.f32 %v1035, %v580
        %v1037 = vadd.f32 %v1036, 1e-05
        %v1038 = vrsqrt.pop %v1037
        %v1039 = vmul.f32 %v1038, %v1037
        %v1040 = vmul.f32 %v1039, %v1038
        %v1041 = vmul.f32 0.5, %v1040
        %v1042 = vsub.f32 1.5, %v1041
        %v1043 = vmul.f32 %v1038, %v1042
        %vm1044 = vweird.f32 %v1037
        %vm1045 = vweird.f32 %v1038
        %vm1046 = vmor %vm1044, %vm1045
        %v1047 = vsel %vm1046, %v1038, %v1043
        %v1048 = vmul.f32 %v1031, %v1047
        %v1049 = vld [vmem:[%s518] sm:$0x1]
        %v1051 = vperm.slane %v1049, 0
        %v1053 = vmul.f32 %v1048, %v1051
        %v1054 = vpack.c.bf16 %v1053, %v1053
        %v1055 = vld [vmem:[%s523] sm:$0xff]
        %v1056 = vld [vmem:[%s523 + $0x8] sm:$0xf]
        %v1057 = vld [vmem:[%s523 + $0xc] sm:$0xff]
        %v1058 = vld [vmem:[%s523 + $0x14] sm:$0xf]
        %v1059 = vld [vmem:[%s523 + $0x18] sm:$0xff]
        %v1060 = vld [vmem:[%s523 + $0x20] sm:$0xf]
        %v1061 = vld [vmem:[%s523 + $0x24] sm:$0xff]
        %v1062 = vld [vmem:[%s523 + $0x2c] sm:$0xf]
        %v1063 = vld [vmem:[%s523 + $0x30] sm:$0xff]
        %v1064 = vld [vmem:[%s523 + $0x38] sm:$0xf]
        %v1065 = vld [vmem:[%s523 + $0x3c] sm:$0xff]
        %v1066 = vld [vmem:[%s523 + $0x44] sm:$0xf]
        %v1067 = vld [vmem:[%s523 + $0x48] sm:$0xff]
        %v1068 = vld [vmem:[%s523 + $0x50] sm:$0xf]
        %v1069 = vld [vmem:[%s523 + $0x54] sm:$0xff]
        %v1070 = vld [vmem:[%s523 + $0x5c] sm:$0xf]
        %v1087 = vunpack.c.l.b16 %v1055
        %v1088 = vunpack.c.h.b16 %v1055
        %v1089 = vunpack.c.l.b16 %v1056
        %v1090 = vunpack.c.l.b16 %v1057
        %v1091 = vunpack.c.h.b16 %v1057
        %v1092 = vunpack.c.l.b16 %v1058
        %v1093 = vunpack.c.l.b16 %v1059
        %v1094 = vunpack.c.h.b16 %v1059
        %v1095 = vunpack.c.l.b16 %v1060
        %v1096 = vunpack.c.l.b16 %v1061
        %v1097 = vunpack.c.h.b16 %v1061
        %v1098 = vunpack.c.l.b16 %v1062
        %v1099 = vunpack.c.l.b16 %v1063
        %v1100 = vunpack.c.h.b16 %v1063
        %v1101 = vunpack.c.l.b16 %v1064
        %v1102 = vunpack.c.l.b16 %v1065
        %v1103 = vunpack.c.h.b16 %v1065
        %v1104 = vunpack.c.l.b16 %v1066
        %v1105 = vunpack.c.l.b16 %v1067
        %v1106 = vunpack.c.h.b16 %v1067
        %v1107 = vunpack.c.l.b16 %v1068
        %v1108 = vunpack.c.l.b16 %v1069
        %v1109 = vunpack.c.h.b16 %v1069
        %v1110 = vunpack.c.l.b16 %v1070
        %v1111 = vpack.c.b16 %v1090, %v1087
        %v1112 = vpack.c.b16 %v1091, %v1088
        %v1113 = vpack.c.b16 %v1092, %v1089
        %v1114 = vpack.c.b16 %v1096, %v1093
        %v1115 = vpack.c.b16 %v1097, %v1094
        %v1116 = vpack.c.b16 %v1098, %v1095
        %v1117 = vpack.c.b16 %v1102, %v1099
        %v1118 = vpack.c.b16 %v1103, %v1100
        %v1119 = vpack.c.b16 %v1104, %v1101
        %v1120 = vpack.c.b16 %v1108, %v1105
        %v1121 = vpack.c.b16 %v1109, %v1106
        %v1122 = vpack.c.b16 %v1110, %v1107
        %v1136 = vsel %vm570, %v1054, 0
        %1138 = vmatpush.bf16.msra.mxu0 0
        %1139 = vmatpush.bf16.msra.mxu0 0
        %1140 = vmatpush.bf16.msra.mxu0 0
        %1141 = vmatpush.bf16.msra.mxu0 0
        %1142 = vmatpush.bf16.msra.mxu0 %v1120
        %1143 = vmatpush.bf16.msra.mxu0 %v1117
        %1144 = vmatpush.bf16.msra.mxu0 %v1114
        %1145 = vmatpush.bf16.msra.mxu0 %v1111
        %1146 = vmatmul.bf16.gmra.mxu0 %v1136
        %v1147 = vpop.f32.mrf.mxu0
        %v1148 = vadd.f32 0.0, %v1147
        %v1149 = vpop.f32.mrf.mxu0
        %1150 = vdwg.mxu0
        %1151 = vmatpush.bf16.msra.mxu0 0
        %1152 = vmatpush.bf16.msra.mxu0 0
        %1153 = vmatpush.bf16.msra.mxu0 0
        %1154 = vmatpush.bf16.msra.mxu0 0
        %1155 = vmatpush.bf16.msra.mxu0 %v1121
        %1156 = vmatpush.bf16.msra.mxu0 %v1118
        %1157 = vmatpush.bf16.msra.mxu0 %v1115
        %1158 = vmatpush.bf16.msra.mxu0 %v1112
        %1159 = vmatmul.bf16.gmra.mxu0 %v1136
        %v1160 = vpop.f32.mrf.mxu0
        %v1161 = vadd.f32 0.0, %v1160
        %v1162 = vpop.f32.mrf.mxu0
        %1163 = vdwg.mxu0
        %1164 = vmatpush.bf16.msra.mxu0 0
        %1165 = vmatpush.bf16.msra.mxu0 0
        %1166 = vmatpush.bf16.msra.mxu0 0
        %1167 = vmatpush.bf16.msra.mxu0 0
        %1168 = vmatpush.bf16.msra.mxu0 %v1122
        %1169 = vmatpush.bf16.msra.mxu0 %v1119
        %1170 = vmatpush.bf16.msra.mxu0 %v1116
        %1171 = vmatpush.bf16.msra.mxu0 %v1113
        %1172 = vmatmul.bf16.gmra.mxu0 %v1136
        %v1173 = vpop.f32.mrf.mxu0
        %v1174 = vadd.f32 0.0, %v1173
        %v1175 = vpop.f32.mrf.mxu0
        %1176 = vdwg.mxu0
        %v1177 = vxor.u32 %v1148, 2147483648
        %v1178 = vxor.u32 %v1161, 2147483648
        %v1179 = vmul.f32 %v1177, 1.442695
        %v1180 = vpow.pop %v1179
        %v1181 = vmul.f32 %v1178, 1.442695
        %v1182 = vpow.pop %v1181
        %v1183 = vadd.f32 %v1180, 1.0
        %v1184 = vadd.f32 %v1182, 1.0
        %v1185 = vrcp.pop %v1183
        %v1186 = vmul.f32 %v1183, %v1185
        %v1187 = vsub.f32 1.0, %v1186
        %v1188 = vmul.f32 %v1185, %v1187
        %v1189 = vadd.f32 %v1185, %v1188
        %vm1190 = vweird.f32 %v1183
        %vm1191 = vweird.f32 %v1185
        %vm1192 = vmor %vm1190, %vm1191
        %v1193 = vsel %vm1192, %v1185, %v1189
        %v1194 = vand.u32 2147483647, %v1183
        %vm1195 = vcmp.eq.f32.partialorder %v1194, 8.507059e+37
        %v1196 = vand.u32 %v1183, 2147483648
        %v1197 = vor.u32 1.1754944e-38, %v1196
        %v1198 = vsel %vm1195, %v1197, %v1193
        %v1199 = vmul.f32 1.0, %v1198
        %v1200 = vrcp.pop %v1184
        %v1201 = vmul.f32 %v1184, %v1200
        %v1202 = vsub.f32 1.0, %v1201
        %v1203 = vmul.f32 %v1200, %v1202
        %v1204 = vadd.f32 %v1200, %v1203
        %vm1205 = vweird.f32 %v1184
        %vm1206 = vweird.f32 %v1200
        %vm1207 = vmor %vm1205, %vm1206
        %v1208 = vsel %vm1207, %v1200, %v1204
        %v1209 = vand.u32 2147483647, %v1184
        %vm1210 = vcmp.eq.f32.partialorder %v1209, 8.507059e+37
        %v1211 = vand.u32 %v1184, 2147483648
        %v1212 = vor.u32 1.1754944e-38, %v1211
        %v1213 = vsel %vm1210, %v1212, %v1208
        %v1214 = vmul.f32 1.0, %v1213
        %v1215 = vmul.f32 %v1148, %v1199
        %v1216 = vmul.f32 %v1161, %v1214
        %1219 = vrot.lane.b32.xlu0 %v1161, 64
        %v1220 = vpop.permute.xlu0 %1219
        %1221 = vrot.lane.b32.xlu0 %v1174, 64
        %v1222 = vpop.permute.xlu0 %1221
        %v1223 = vsel %vm570, %v1220, %v1222
        %v1226 = vmul.f32 %v1215, %v1223
        %v1227 = vmul.f32 %v1216, %v1222
        %v1228 = vpack.c.bf16 %v1226, %v1226
        %v1229 = vpack.c.bf16 %v1227, %v1227
        %v1230 = vld [vmem:[%s528] sm:$0xf]
        %v1231 = vld [vmem:[%s528 + $0x4] sm:$0xf]
        %v1232 = vld [vmem:[%s528 + $0x8] sm:$0xf]
        %v1233 = vld [vmem:[%s528 + $0xc] sm:$0xf]
        %v1234 = vld [vmem:[%s528 + $0x10] sm:$0xf]
        %v1235 = vld [vmem:[%s528 + $0x14] sm:$0xf]
        %v1236 = vld [vmem:[%s528 + $0x18] sm:$0xf]
        %v1237 = vld [vmem:[%s528 + $0x1c] sm:$0xf]
        %v1238 = vld [vmem:[%s528 + $0x20] sm:$0xf]
        %v1239 = vld [vmem:[%s528 + $0x24] sm:$0xf]
        %v1240 = vld [vmem:[%s528 + $0x28] sm:$0xf]
        %v1241 = vld [vmem:[%s528 + $0x2c] sm:$0xf]
        %v1242 = vld [vmem:[%s528 + $0x30] sm:$0xf]
        %v1243 = vld [vmem:[%s528 + $0x34] sm:$0xf]
        %v1244 = vld [vmem:[%s528 + $0x38] sm:$0xf]
        %v1245 = vld [vmem:[%s528 + $0x3c] sm:$0xf]
        %v1246 = vld [vmem:[%s528 + $0x40] sm:$0xf]
        %v1247 = vld [vmem:[%s528 + $0x44] sm:$0xf]
        %v1248 = vld [vmem:[%s528 + $0x48] sm:$0xf]
        %v1249 = vld [vmem:[%s528 + $0x4c] sm:$0xf]
        %v1250 = vld [vmem:[%s528 + $0x50] sm:$0xf]
        %v1251 = vld [vmem:[%s528 + $0x54] sm:$0xf]
        %v1252 = vld [vmem:[%s528 + $0x58] sm:$0xf]
        %v1253 = vld [vmem:[%s528 + $0x5c] sm:$0xf]
        %v1278 = vunpack.c.l.b16 %v1230
        %v1279 = vunpack.c.l.b16 %v1231
        %v1280 = vunpack.c.l.b16 %v1232
        %v1281 = vunpack.c.l.b16 %v1233
        %v1282 = vunpack.c.l.b16 %v1234
        %v1283 = vunpack.c.l.b16 %v1235
        %v1284 = vunpack.c.l.b16 %v1236
        %v1285 = vunpack.c.l.b16 %v1237
        %v1286 = vunpack.c.l.b16 %v1238
        %v1287 = vunpack.c.l.b16 %v1239
        %v1288 = vunpack.c.l.b16 %v1240
        %v1289 = vunpack.c.l.b16 %v1241
        %v1290 = vunpack.c.l.b16 %v1242
        %v1291 = vunpack.c.l.b16 %v1243
        %v1292 = vunpack.c.l.b16 %v1244
        %v1293 = vunpack.c.l.b16 %v1245
        %v1294 = vunpack.c.l.b16 %v1246
        %v1295 = vunpack.c.l.b16 %v1247
        %v1296 = vunpack.c.l.b16 %v1248
        %v1297 = vunpack.c.l.b16 %v1249
        %v1298 = vunpack.c.l.b16 %v1250
        %v1299 = vunpack.c.l.b16 %v1251
        %v1300 = vunpack.c.l.b16 %v1252
        %v1301 = vunpack.c.l.b16 %v1253
        %v1302 = vpack.c.b16 %v1279, %v1278
        %v1303 = vpack.c.b16 %v1281, %v1280
        %v1304 = vpack.c.b16 %v1283, %v1282
        %v1305 = vpack.c.b16 %v1285, %v1284
        %v1306 = vpack.c.b16 %v1287, %v1286
        %v1307 = vpack.c.b16 %v1289, %v1288
        %v1308 = vpack.c.b16 %v1291, %v1290
        %v1309 = vpack.c.b16 %v1293, %v1292
        %v1310 = vpack.c.b16 %v1295, %v1294
        %v1311 = vpack.c.b16 %v1297, %v1296
        %v1312 = vpack.c.b16 %v1299, %v1298
        %v1313 = vpack.c.b16 %v1301, %v1300
        %v1327 = vsel %vm570, %v1229, 0
        %1329 = vmatpush.bf16.msra.mxu0 %v1309
        %1330 = vmatpush.bf16.msra.mxu0 %v1308
        %1331 = vmatpush.bf16.msra.mxu0 %v1307
        %1332 = vmatpush.bf16.msra.mxu0 %v1306
        %1333 = vmatpush.bf16.msra.mxu0 %v1305
        %1334 = vmatpush.bf16.msra.mxu0 %v1304
        %1335 = vmatpush.bf16.msra.mxu0 %v1303
        %1336 = vmatpush.bf16.msra.mxu0 %v1302
        %1337 = vmatmul.bf16.gmra.mxu0 %v1228
        %v1338 = vpop.f32.mrf.mxu0
        %v1339 = vadd.f32 0.0, %v1338
        %v1340 = vpop.f32.mrf.mxu0
        %1341 = vdwg.mxu0
        %1342 = vmatpush.bf16.msra.mxu0 0
        %1343 = vmatpush.bf16.msra.mxu0 0
        %1344 = vmatpush.bf16.msra.mxu0 0
        %1345 = vmatpush.bf16.msra.mxu0 0
        %1346 = vmatpush.bf16.msra.mxu0 %v1313
        %1347 = vmatpush.bf16.msra.mxu0 %v1312
        %1348 = vmatpush.bf16.msra.mxu0 %v1311
        %1349 = vmatpush.bf16.msra.mxu0 %v1310
        %1350 = vmatmul.bf16.gmra.mxu0 %v1327
        %v1351 = vpop.f32.mrf.mxu0
        %v1352 = vadd.f32 %v1339, %v1351
        %v1353 = vpop.f32.mrf.mxu0
        %1354 = vdwg.mxu0
        %v1355 = vadd.f32 %v1031, %v1352
        %1356 = vst.msk [vmem:[#allocation2] sm:$0xff] %vm570, %v1355
        %p1357 = scmp.eq.s32.totalorder %s31, 1
        // Predicated region
        $region73: #{llama_forward.1} parent=67 // pred_check
          %p1358 = pneg %p1357
        $region74: #{llama_forward.1} parent=67 // pred_check_branch
          %1360 = sbr.rel (%p1358) target = $region76
        $region75: #{llama_forward.1} parent=67 // pred_region
          %v1361 = vmul.f32 %v1355, %v1355
          %v1362 = vsel %vm570, %v1361, 0.0
          %1363 = vadd.xlane.f32.xlu0 %v1362
          %v1364 = vpop.xlane.xlu0 %1363
          %v1365 = vmul.f32 %v1364, %v580
          %v1366 = vadd.f32 %v1365, 1e-05
          %v1367 = vrsqrt.pop %v1366
          %v1368 = vmul.f32 %v1367, %v1366
          %v1369 = vmul.f32 %v1368, %v1367
          %v1370 = vmul.f32 0.5, %v1369
          %v1371 = vsub.f32 1.5, %v1370
          %v1372 = vmul.f32 %v1367, %v1371
          %vm1373 = vweird.f32 %v1366
          %vm1374 = vweird.f32 %v1367
          %vm1375 = vmor %vm1373, %vm1374
          %v1376 = vsel %vm1375, %v1367, %v1372
          %v1377 = vmul.f32 %v1355, %v1376
          %v1378 = vld [vmem:[%s10] sm:$0x1]
          %v1380 = vperm.slane %v1378, 0
          %v1382 = vmul.f32 %v1377, %v1380
          %v1383 = vpack.c.bf16 %v1382, %v1382
          %v1384 = vld [vmem:[%s11] sm:$0xff]
          %v1385 = vld [vmem:[%s11 + $0x8] sm:$0xff]
          %v1386 = vld [vmem:[%s11 + $0x10] sm:$0xff]
          %v1387 = vld [vmem:[%s11 + $0x18] sm:$0xff]
          %v1388 = vld [vmem:[%s11 + $0x20] sm:$0xff]
          %v1389 = vld [vmem:[%s11 + $0x28] sm:$0xff]
          %v1390 = vld [vmem:[%s11 + $0x30] sm:$0xff]
          %v1391 = vld [vmem:[%s11 + $0x38] sm:$0xff]
          %v1400 = vunpack.c.l.b16 %v1384
          %v1401 = vunpack.c.h.b16 %v1384
          %v1402 = vunpack.c.l.b16 %v1385
          %v1403 = vunpack.c.h.b16 %v1385
          %v1404 = vunpack.c.l.b16 %v1386
          %v1405 = vunpack.c.h.b16 %v1386
          %v1406 = vunpack.c.l.b16 %v1387
          %v1407 = vunpack.c.h.b16 %v1387
          %v1408 = vunpack.c.l.b16 %v1388
          %v1409 = vunpack.c.h.b16 %v1388
          %v1410 = vunpack.c.l.b16 %v1389
          %v1411 = vunpack.c.h.b16 %v1389
          %v1412 = vunpack.c.l.b16 %v1390
          %v1413 = vunpack.c.h.b16 %v1390
          %v1414 = vunpack.c.l.b16 %v1391
          %v1415 = vunpack.c.h.b16 %v1391
          %v1416 = vpack.c.b16 %v1402, %v1400
          %v1417 = vpack.c.b16 %v1403, %v1401
          %v1418 = vpack.c.b16 %v1406, %v1404
          %v1419 = vpack.c.b16 %v1407, %v1405
          %v1420 = vpack.c.b16 %v1410, %v1408
          %v1421 = vpack.c.b16 %v1411, %v1409
          %v1422 = vpack.c.b16 %v1414, %v1412
          %v1423 = vpack.c.b16 %v1415, %v1413
          %v1433 = vsel %vm570, %v1383, 0
          %1435 = vmatpush.bf16.msra.mxu0 0
          %1436 = vmatpush.bf16.msra.mxu0 0
          %1437 = vmatpush.bf16.msra.mxu0 0
          %1438 = vmatpush.bf16.msra.mxu0 0
          %1439 = vmatpush.bf16.msra.mxu0 %v1422
          %1440 = vmatpush.bf16.msra.mxu0 %v1420
          %1441 = vmatpush.bf16.msra.mxu0 %v1418
          %1442 = vmatpush.bf16.msra.mxu0 %v1416
          %1443 = vmatmul.bf16.gmra.mxu0 %v1433
          %v1444 = vpop.f32.mrf.mxu0
          %v1445 = vadd.f32 0.0, %v1444
          %v1446 = vpop.f32.mrf.mxu0
          %1447 = vdwg.mxu0
          %1448 = vmatpush.bf16.msra.mxu0 0
          %1449 = vmatpush.bf16.msra.mxu0 0
          %1450 = vmatpush.bf16.msra.mxu0 0
          %1451 = vmatpush.bf16.msra.mxu0 0
          %1452 = vmatpush.bf16.msra.mxu0 %v1423
          %1453 = vmatpush.bf16.msra.mxu0 %v1421
          %1454 = vmatpush.bf16.msra.mxu0 %v1419
          %1455 = vmatpush.bf16.msra.mxu0 %v1417
          %1456 = vmatmul.bf16.gmra.mxu0 %v1433
          %v1457 = vpop.f32.mrf.mxu0
          %v1458 = vadd.f32 0.0, %v1457
          %v1459 = vpop.f32.mrf.mxu0
          %1460 = vdwg.mxu0
          %1461 = vst [vmem:[%s498] sm:$0xff] %v1445
          %1462 = vst [vmem:[%s498 + $0x8] sm:$0xff] %v1458
        $region76: #{llama_forward.1} parent=67 // pred_fallthru
          _
        %s1463 = sand.u32 %s333, 1
        %s1464 = scalar_lea.sflag [#allocation4], %s1463
        %s1465 = sand.u32 %s333, 1
        %s1466 = smul.addr %s1465, 16
        %s1467 = scalar_lea.vmem [#allocation3], %s1466
        // Predicated region
        $region77: #{llama_forward.1} parent=67 // pred_check
          %p1468 = pneg %p343
        $region78: #{llama_forward.1} parent=67 // pred_check_branch
          %1470 = sbr.rel (%p1468) target = $region80
        $region79: #{llama_forward.1} parent=67 // pred_region
          %1472 = vsyncadd %s1464, 0
          %s1473 = smul.addr %s30, 2
          %s1474 = smul.addr %s1473, 8
          %s1475 = scalar_lea.hbm %s12, %s1474
          %s1477 = sshll.u32 %s1467, 4
          %s1478 = int_to_ptr.vmem [resolvable:$true] %s1477
          %s1479 = sshll.u32 %s1475, 4
          %s1480 = int_to_ptr.hbm [resolvable:$true] %s1479
          %1482 = dma.vmem_to_hbm [thread:$0]  %s1478, 256, %s1480, %s1464
        $region80: #{llama_forward.1} parent=67 // pred_fallthru
          _
      $region68: #{llama_forward.1} parent=5 // pred_fallthru
        _
      %p1483 = scmp.le.s32.totalorder 2, %s21
      // Predicated region
      $region81: #{llama_forward.1} parent=5 // pred_check
        %p1484 = pneg %p1483
      $region82: #{llama_forward.1} parent=5 // pred_check_branch
        %1486 = sbr.rel (%p1484) target = $region84
      $region83: #{llama_forward.1} parent=5 // pred_region
        %s1487 = ssub.s32 %s21, 2
        // Predicated region
        $region85: #{llama_forward.1} parent=83 // pred_check
          %p1488 = pneg %p349
        $region86: #{llama_forward.1} parent=83 // pred_check_branch
          %1490 = sbr.rel (%p1488) target = $region88
        $region87: #{llama_forward.1} parent=83 // pred_region
          %s1491 = sand.u32 %s334, 1
          %s1492 = scalar_lea.sflag [#allocation4], %s1491
          %s1493 = sand.u32 %s334, 1
          %s1494 = smul.addr %s1493, 16
          %s1495 = scalar_lea.vmem [#allocation3], %s1494
          %1497 = dma.done %s1492, 256
        $region88: #{llama_forward.1} parent=83 // pred_fallthru
          _
      $region84: #{llama_forward.1} parent=5 // pred_fallthru
        _
    $region6: #{llama_forward.1} parent=1 // loop_footer
      %s25 = sadd.s32 1, %s21
    $region7: #{llama_forward.1} parent=1 // loop_footer_branch
      %20 = sbr.rel target = $region3
    $region8: #{llama_forward.1} parent=1 // loop_exit
      _
    %1498 = vsyncpa [#allocation4], 1
    %s1499 = scalar_lea.sflag [#allocation4], 1
    %1500 = vsyncpa %s1499, 1

</llo_original>
